<compile_context>
chip_gen: v7x
topology: tpu7x:2x2x1
jax: 0.10.0
libtpu: 0.0.40
codegen_flags: <defaults>
</compile_context>

<pallas_src>
import functools

import jax
import jax.numpy as jnp
import numpy as np
from jax.experimental import pallas as pl
from jax.experimental.pallas import tpu as pltpu


# ------------------------------ fused kernel --------------------------------

def fused_clip_kernel(p_ref, w_ref, g_ref, b_ref, proj_ref, txt_ref, o_ref,
                      *, b_tile, clip_len):
    # p_ref: (b_tile*clip_len, n_patch, K) bf16, frame-major patch tokens.
    # Per-frame patch pooling BEFORE the embed matmul (linear -> exact
    # reassociation); shrinks the dominant matmul's M-dim by n_patch x and
    # avoids rebuilding a pooling matrix with iota every grid step.
    pooled = jnp.mean(p_ref[...].astype(jnp.float32), axis=1)     # (F, K) f32

    # Patch embedding: bf16 operands -> f32 accumulation on the MXU.
    tok = jnp.dot(pooled.astype(jnp.bfloat16), w_ref[...],
                  preferred_element_type=jnp.float32)             # (F, WIDTH)

    # LayerNorm (f32 elementwise; rsqrt goes to the EUP slot).
    mu = jnp.mean(tok, axis=-1, keepdims=True)
    var = jnp.mean((tok - mu) ** 2, axis=-1, keepdims=True)
    normed = (tok - mu) * jax.lax.rsqrt(var + 1e-5)
    normed = normed * g_ref[...] + b_ref[...]

    # Projection to the CLIP feature dim.
    img = jnp.dot(normed.astype(jnp.bfloat16), proj_ref[...],
                  preferred_element_type=jnp.float32)             # (F, FEAT)

    # L2-normalize image features (rsqrt on the EUP).
    img = img * jax.lax.rsqrt(jnp.sum(img * img, axis=-1, keepdims=True))

    # Similarity; logit_scale and 1/clip_len are pre-folded into txt_ref
    # (padded class columns stay exactly zero: 0 * scale == 0).
    logits = jnp.dot(img.astype(jnp.bfloat16), txt_ref[...],
                     preferred_element_type=jnp.float32)          # (F, CLS_PAD)

    # Temporal reduction: the mean is already folded into txt -> plain sum.
    if b_tile == 1:
        o_ref[...] = jnp.sum(logits, axis=0, keepdims=True)
    else:
        o_ref[...] = jnp.sum(
            logits.reshape(b_tile, clip_len, logits.shape[-1]), axis=1)


def _pick_b_tile(bz):
    # Prefer sublane-friendly batch tiles while keeping >= 2 grid steps so the
    # "parallel" batch axis can split across v7x's two TensorCores.
    for bt in (8, 4, 2):
        if bz % bt == 0 and bz // bt >= 2:
            return bt
    return 1


def fused_clip_forward(patches, conv_w_t, ln_gamma, ln_beta, proj, txt_t,
                       *, bz, clip_len, b_tile):
    total_frames, n_patch, k_dim = patches.shape        # total_frames = bz*clip_len
    width = conv_w_t.shape[1]
    feat = proj.shape[1]
    cls_pad = txt_t.shape[1]
    n_steps = bz // b_tile
    fps = b_tile * clip_len                              # frames per grid step

    kern = functools.partial(fused_clip_kernel, b_tile=b_tile, clip_len=clip_len)

    flops = int(2 * total_frames * (k_dim * width + width * feat + feat * cls_pad)
                + 2 * total_frames * n_patch * k_dim)
    bytes_accessed = int(total_frames * n_patch * k_dim * 2         # bf16 patches
                         + (k_dim * width + width * feat + feat * cls_pad) * 2
                         + 2 * width * 4 + bz * cls_pad * 4)

    out = pl.pallas_call(
        kern,
        out_shape=jax.ShapeDtypeStruct((n_steps, b_tile, cls_pad), jnp.float32),
        grid=(n_steps,),
        in_specs=[
            pl.BlockSpec((fps, n_patch, k_dim), lambda b: (b, 0, 0)),
            # Grid-invariant operands: constant index_map -> fetched once.
            # TODO(synk): single-buffer these (pipeline_mode=pl.Buffered(1))
            # when scaling to real ViT widths; negligible VMEM at these sizes.
            pl.BlockSpec((k_dim, width), lambda b: (0, 0)),
            pl.BlockSpec((1, width), lambda b: (0, 0)),
            pl.BlockSpec((1, width), lambda b: (0, 0)),
            pl.BlockSpec((width, feat), lambda b: (0, 0)),
            pl.BlockSpec((feat, cls_pad), lambda b: (0, 0)),
        ],
        out_specs=pl.BlockSpec((None, b_tile, cls_pad), lambda b: (b, 0, 0)),
        compiler_params=pltpu.CompilerParams(
            dimension_semantics=("parallel",),
            vmem_limit_bytes=32 * 1024 * 1024),
        cost_estimate=pl.CostEstimate(
            flops=flops,
            transcendentals=int(2 * total_frames),
            bytes_accessed=bytes_accessed),
    )(patches, conv_w_t, ln_gamma, ln_beta, proj, txt_t)
    return out.reshape(bz, cls_pad)


# --------------------------- BasicClipVideo (JAX) ---------------------------

class BasicClipVideoPallas:
    """Synthetic, deterministic re-implementation of BasicClipVideo.forward
    (eval branch, APPLY_CATEGORY_GENERIC_PROMPT=False) using one fused Pallas
    TPU kernel."""

    PATCH = 16
    WIDTH = 128        # ViT width (reduced), lane-dense
    FEAT = 512         # CLIP feature dim (matches alpha/beta Parameter size)
    NUM_CLASSES = 16
    CLS_PAD = 128      # class dim zero-padded to a full lane width

    def __init__(self, key):
        k1, k2, k3 = jax.random.split(key, 3)
        C, P, Wd, F = 3, self.PATCH, self.WIDTH, self.FEAT
        # conv1 of CLIP visual stem: (width, C, P, P), no bias -> flattened.
        conv_w = jax.random.normal(k1, (Wd, C * P * P), jnp.float32) * 0.02
        self.conv_w_t_f32 = conv_w.T                       # (C*P*P, WIDTH) master
        self.conv_w_t_bf16 = self.conv_w_t_f32.astype(jnp.bfloat16)
        self.ln_gamma = jnp.ones((1, Wd), jnp.float32)
        self.ln_beta = jnp.zeros((1, Wd), jnp.float32)
        self.proj_f32 = jax.random.normal(k2, (Wd, F), jnp.float32) * 0.05
        self.proj_bf16 = self.proj_f32.astype(jnp.bfloat16)
        # self.txt_encode (cached text features from the CLIP text encoder).
        self.txt_encode_f32 = jax.random.normal(
            k3, (self.NUM_CLASSES, F), jnp.float32)
        # Pre-normalize + pre-transpose once (constant cache in eval mode),
        # zero-pad classes to CLS_PAD lanes (padded logits stay 0, sliced off).
        txt_unit = self.txt_encode_f32 / jnp.linalg.norm(
            self.txt_encode_f32, axis=-1, keepdims=True)
        self.txt_t_unit_pad = jnp.pad(
            txt_unit.T, ((0, 0), (0, self.CLS_PAD - self.NUM_CLASSES)))
        # alpha/beta Parameters (ones(512)); unused when
        # APPLY_CATEGORY_GENERIC_PROMPT is False, as here.
        self.alpha = jnp.ones((F,), jnp.float32)
        self.beta = jnp.ones((F,), jnp.float32)
        # CLIP logit_scale init: log(1/0.07); forward uses exp().
        self.logit_scale_exp = float(np.exp(np.log(1.0 / 0.07)))
        # jit the whole per-call path (single transpose, cast, fused kernel).
        self._forward_jit = jax.jit(self._forward_impl)

    # -- helpers -------------------------------------------------------------

    def _extract_patch_tokens(self, x):
        # (bz, C, T, H, W) -> (bz*T, n_patch, C*P*P) with ONE transpose
        # (one HBM read+write) instead of a frame-permute + 6D patch-permute.
        # Channel-major per patch, matching conv weight .reshape(width, -1).
        bz, c, t, h, w = x.shape
        P = self.PATCH
        gh, gw = h // P, w // P
        x = x.reshape(bz, c, t, gh, P, gw, P)
        x = jnp.transpose(x, (0, 2, 3, 5, 1, 4, 6))   # (bz, t, gh, gw, c, P, P)
        return x.reshape(bz * t, gh * gw, c * P * P), gh * gw

    # -- forward (eval branch of BasicClipVideo.forward) ----------------------

    def _forward_impl(self, x):
        bz, c, t, h, w = x.shape
        tokens, _ = self._extract_patch_tokens(x)          # (bz*t, np, K) f32
        patches = tokens.astype(jnp.bfloat16)              # fused into transpose
        b_tile = _pick_b_tile(bz)
        # Fold logit_scale and the temporal mean (1/t) into the text features;
        # constant under jit (XLA folds it), padded columns stay exactly zero.
        txt = (self.txt_t_unit_pad
               * (self.logit_scale_exp / t)).astype(jnp.bfloat16)
        pred_pad = fused_clip_forward(
            patches, self.conv_w_t_bf16, self.ln_gamma, self.ln_beta,
            self.proj_bf16, txt, bz=bz, clip_len=t, b_tile=b_tile)
        return pred_pad[:, :self.NUM_CLASSES]               # (bz, CLS)

    def forward(self, x_list, labels=None, update=False):
        assert len(x_list) == 1                              # num_pathways == 1
        return self._forward_jit(x_list[0])

    # -- pure-JAX references ---------------------------------------------------

    def reference_kernel_math(self, x, *, use_bf16):
        """Pure-JAX emulation of the fused kernel's math (and, when use_bf16,
        its exact bf16 rounding points) for a tight correctness check."""
        bz, c, t, h, w = x.shape
        tokens, n_patch = self._extract_patch_tokens(x)      # (bz*t, np, K) f32
        if use_bf16:
            w_t, prj = self.conv_w_t_bf16, self.proj_bf16
            tokens = tokens.astype(jnp.bfloat16)
            cast = lambda a: a.astype(jnp.bfloat16)
        else:
            w_t, prj = self.conv_w_t_f32, self.proj_f32
            cast = lambda a: a
        pooled = jnp.mean(tokens.astype(jnp.float32), axis=1)
        tok = jnp.dot(cast(pooled), w_t, preferred_element_type=jnp.float32)
        mu = jnp.mean(tok, axis=-1, keepdims=True)
        var = jnp.mean((tok - mu) ** 2, axis=-1, keepdims=True)
        normed = (tok - mu) * jax.lax.rsqrt(var + 1e-5)
        normed = normed * self.ln_gamma + self.ln_beta
        img = jnp.dot(cast(normed), prj, preferred_element_type=jnp.float32)
        img = img * jax.lax.rsqrt(jnp.sum(img * img, axis=-1, keepdims=True))
        txt = cast(self.txt_t_unit_pad * (self.logit_scale_exp / t))
        logits = jnp.dot(cast(img), txt, preferred_element_type=jnp.float32)
        pred = jnp.sum(logits.reshape(bz, t, -1), axis=1)
        return pred[:, :self.NUM_CLASSES]

    def reference_module_math(self, x):
        """f32 reference in the ORIGINAL module op order (embed then pool,
        divide-by-norm, explicit scale multiply, temporal mean)."""
        bz, c, t, h, w = x.shape
        tokens, n_patch = self._extract_patch_tokens(x)
        tok = tokens.reshape(bz * t * n_patch, -1) @ self.conv_w_t_f32
        tok = tok.reshape(bz * t, n_patch, -1).mean(1)
        mu = tok.mean(-1, keepdims=True)
        var = ((tok - mu) ** 2).mean(-1, keepdims=True)
        img = (tok - mu) / jnp.sqrt(var + 1e-5) * self.ln_gamma + self.ln_beta
        img = img @ self.proj_f32
        img = img / jnp.linalg.norm(img, axis=-1, keepdims=True)
        txt = self.txt_encode_f32 / jnp.linalg.norm(
            self.txt_encode_f32, axis=-1, keepdims=True)
        logits = self.logit_scale_exp * (img @ txt.T)
        return logits.reshape(bz, t, -1).mean(1)


# ---------------------------------- main -------------------------------------

if __name__ == "__main__":
    key = jax.random.PRNGKey(0)
    k_model, k_x = jax.random.split(key)

    model = BasicClipVideoPallas(k_model)

    bz, channel, clip_len, H, W = 2, 3, 4, 32, 32
    x = jax.random.normal(k_x, (bz, channel, clip_len, H, W), jnp.float32)

    pred = jax.block_until_ready(model.forward([x], None))
    assert pred.shape == (bz, BasicClipVideoPallas.NUM_CLASSES)

    # 1) Kernel vs. pure-JAX emulation of the same math at the same (bf16 MXU
    #    operand) precision -> tight tolerance, validates all kernel plumbing.
    ref_bf16 = jax.block_until_ready(
        model.reference_kernel_math(x, use_bf16=True))
    np.testing.assert_allclose(np.asarray(pred), np.asarray(ref_bf16),
                               rtol=1e-2, atol=1e-2)

    # 2) f32 algebra check (no kernel): pool-before-embed + scale/mean folding
    #    + rsqrt forms reproduce the original module's op order exactly.
    ref_fold = model.reference_kernel_math(x, use_bf16=False)
    ref_orig = model.reference_module_math(x)
    np.testing.assert_allclose(np.asarray(ref_fold), np.asarray(ref_orig),
                               rtol=1e-3, atol=1e-3)

    print("KERNEL_OK")
</pallas_src>

<mosaic_0001>
module attributes {stable_mosaic.version = 11 : i64} {
  func.func @fused_clip_kernel(%arg0: i32, %arg1: memref<4x4x768xbf16, #tpu.memory_space<vmem>>, %arg2: memref<768x128xbf16, #tpu.memory_space<vmem>>, %arg3: memref<1x128xf32, #tpu.memory_space<vmem>>, %arg4: memref<1x128xf32, #tpu.memory_space<vmem>>, %arg5: memref<128x512xbf16, #tpu.memory_space<vmem>>, %arg6: memref<512x128xbf16, #tpu.memory_space<vmem>>, %arg7: memref<1x1x128xf32, #tpu.memory_space<vmem>>) attributes {dimension_semantics = [#tpu.dimension_semantics<parallel>], iteration_bounds = array<i64: 2>, scalar_prefetch = 0 : i64, scratch_operands = 0 : i64, tpu.core_type = #tpu.core_type<tc>, window_params = [{transform_indices = @transform_0, window_bounds = array<i64: 4, 4, 768>}, {pipeline_mode = #tpu.pipeline_mode<synchronous>, transform_indices = @transform_1, window_bounds = array<i64: 768, 128>}, {pipeline_mode = #tpu.pipeline_mode<synchronous>, transform_indices = @transform_2, window_bounds = array<i64: 1, 128>}, {pipeline_mode = #tpu.pipeline_mode<synchronous>, transform_indices = @transform_3, window_bounds = array<i64: 1, 128>}, {pipeline_mode = #tpu.pipeline_mode<synchronous>, transform_indices = @transform_4, window_bounds = array<i64: 128, 512>}, {pipeline_mode = #tpu.pipeline_mode<synchronous>, transform_indices = @transform_5, window_bounds = array<i64: 512, 128>}, {transform_indices = @transform_6, window_bounds = array<i64: 1, 1, 128>}]} {
    %c0 = arith.constant 0 : index
    %c0_0 = arith.constant 0 : index
    %c0_1 = arith.constant 0 : index
    %0 = vector.load %arg1[%c0, %c0_0, %c0_1] : memref<4x4x768xbf16, #tpu.memory_space<vmem>>, vector<4x4x768xbf16>
    %1 = arith.extf %0 : vector<4x4x768xbf16> to vector<4x4x768xf32>
    %cst = arith.constant dense<0.000000e+00> : vector<4x768xf32>
    %2 = vector.multi_reduction <add>, %1, %cst [1] : vector<4x4x768xf32> to vector<4x768xf32>
    %cst_2 = arith.constant 4.000000e+00 : f32
    %3 = vector.broadcast %cst_2 : f32 to vector<4x768xf32>
    %4 = arith.divf %2, %3 : vector<4x768xf32>
    %5 = arith.truncf %4 : vector<4x768xf32> to vector<4x768xbf16>
    %c0_3 = arith.constant 0 : index
    %c0_4 = arith.constant 0 : index
    %6 = vector.load %arg2[%c0_3, %c0_4] : memref<768x128xbf16, #tpu.memory_space<vmem>>, vector<768x128xbf16>
    %cst_5 = arith.constant dense<0.000000e+00> : vector<4x128xf32>
    %7 = tpu.matmul %5, %6, %cst_5 {dimension_numbers = #tpu.dot_dimension_numbers<[1], [0], [0], [1], [0, 0, 1, 1], [], []>} : vector<4x768xbf16>, vector<768x128xbf16>, vector<4x128xf32> -> vector<4x128xf32>
    %cst_6 = arith.constant dense<0.000000e+00> : vector<4xf32>
    %8 = vector.multi_reduction <add>, %7, %cst_6 [1] : vector<4x128xf32> to vector<4xf32>
    %9 = vector.shape_cast %8 : vector<4xf32> to vector<4x1xf32>
    %cst_7 = arith.constant 1.280000e+02 : f32
    %10 = vector.broadcast %cst_7 : f32 to vector<4x1xf32>
    %11 = arith.divf %9, %10 : vector<4x1xf32>
    %12 = vector.broadcast %11 : vector<4x1xf32> to vector<4x128xf32>
    %13 = arith.subf %7, %12 : vector<4x128xf32>
    %14 = arith.mulf %13, %13 : vector<4x128xf32>
    %cst_8 = arith.constant dense<0.000000e+00> : vector<4xf32>
    %15 = vector.multi_reduction <add>, %14, %cst_8 [1] : vector<4x128xf32> to vector<4xf32>
    %16 = vector.shape_cast %15 : vector<4xf32> to vector<4x1xf32>
    %cst_9 = arith.constant 1.280000e+02 : f32
    %17 = vector.broadcast %cst_9 : f32 to vector<4x1xf32>
    %18 = arith.divf %16, %17 : vector<4x1xf32>
    %19 = vector.broadcast %11 : vector<4x1xf32> to vector<4x128xf32>
    %20 = arith.subf %7, %19 : vector<4x128xf32>
    %cst_10 = arith.constant 9.99999974E-6 : f32
    %21 = vector.broadcast %cst_10 : f32 to vector<4x1xf32>
    %22 = arith.addf %18, %21 : vector<4x1xf32>
    %23 = math.rsqrt %22 : vector<4x1xf32>
    %24 = vector.broadcast %23 : vector<4x1xf32> to vector<4x128xf32>
    %25 = arith.mulf %20, %24 : vector<4x128xf32>
    %c0_11 = arith.constant 0 : index
    %c0_12 = arith.constant 0 : index
    %26 = vector.load %arg3[%c0_11, %c0_12] : memref<1x128xf32, #tpu.memory_space<vmem>>, vector<1x128xf32>
    %27 = vector.broadcast %26 : vector<1x128xf32> to vector<4x128xf32>
    %28 = arith.mulf %25, %27 : vector<4x128xf32>
    %c0_13 = arith.constant 0 : index
    %c0_14 = arith.constant 0 : index
    %29 = vector.load %arg4[%c0_13, %c0_14] : memref<1x128xf32, #tpu.memory_space<vmem>>, vector<1x128xf32>
    %30 = vector.broadcast %29 : vector<1x128xf32> to vector<4x128xf32>
    %31 = arith.addf %28, %30 : vector<4x128xf32>
    %32 = arith.truncf %31 : vector<4x128xf32> to vector<4x128xbf16>
    %c0_15 = arith.constant 0 : index
    %c0_16 = arith.constant 0 : index
    %33 = vector.load %arg5[%c0_15, %c0_16] : memref<128x512xbf16, #tpu.memory_space<vmem>>, vector<128x512xbf16>
    %cst_17 = arith.constant dense<0.000000e+00> : vector<4x512xf32>
    %34 = tpu.matmul %32, %33, %cst_17 {dimension_numbers = #tpu.dot_dimension_numbers<[1], [0], [0], [1], [0, 0, 1, 1], [], []>} : vector<4x128xbf16>, vector<128x512xbf16>, vector<4x512xf32> -> vector<4x512xf32>
    %35 = arith.mulf %34, %34 : vector<4x512xf32>
    %cst_18 = arith.constant dense<0.000000e+00> : vector<4xf32>
    %36 = vector.multi_reduction <add>, %35, %cst_18 [1] : vector<4x512xf32> to vector<4xf32>
    %37 = vector.shape_cast %36 : vector<4xf32> to vector<4x1xf32>
    %38 = math.rsqrt %37 : vector<4x1xf32>
    %39 = vector.broadcast %38 : vector<4x1xf32> to vector<4x512xf32>
    %40 = arith.mulf %34, %39 : vector<4x512xf32>
    %41 = arith.truncf %40 : vector<4x512xf32> to vector<4x512xbf16>
    %c0_19 = arith.constant 0 : index
    %c0_20 = arith.constant 0 : index
    %42 = vector.load %arg6[%c0_19, %c0_20] : memref<512x128xbf16, #tpu.memory_space<vmem>>, vector<512x128xbf16>
    %cst_21 = arith.constant dense<0.000000e+00> : vector<4x128xf32>
    %43 = tpu.matmul %41, %42, %cst_21 {dimension_numbers = #tpu.dot_dimension_numbers<[1], [0], [0], [1], [0, 0, 1, 1], [], []>} : vector<4x512xbf16>, vector<512x128xbf16>, vector<4x128xf32> -> vector<4x128xf32>
    %cst_22 = arith.constant dense<0.000000e+00> : vector<128xf32>
    %44 = vector.multi_reduction <add>, %43, %cst_22 [0] : vector<4x128xf32> to vector<128xf32>
    %45 = vector.shape_cast %44 : vector<128xf32> to vector<1x128xf32>
    %c0_23 = arith.constant 0 : index
    %c0_24 = arith.constant 0 : index
    %c0_25 = arith.constant 0 : index
    %46 = vector.load %arg7[%c0_23, %c0_24, %c0_25] : memref<1x1x128xf32, #tpu.memory_space<vmem>>, vector<1x1x128xf32>
    %47 = vector.shape_cast %46 : vector<1x1x128xf32> to vector<1x128xf32>
    %48 = vector.shape_cast %45 : vector<1x128xf32> to vector<1x1x128xf32>
    tpu.vector_store %arg7[%c0_23, %c0_24, %c0_25], %48 {strides = array<i32>} : memref<1x1x128xf32, #tpu.memory_space<vmem>>, vector<1x1x128xf32>,
    return
  }
  func.func @transform_0(%arg0: i32) -> (i32, i32, i32) {
    %c0_i32 = arith.constant 0 : i32
    %c0_i32_0 = arith.constant 0 : i32
    %c0_i32_1 = arith.constant 0 : i32
    return %arg0, %c0_i32, %c0_i32_0 : i32, i32, i32
  }
  func.func @transform_1(%arg0: i32) -> (i32, i32) {
    %c0_i32 = arith.constant 0 : i32
    %c0_i32_0 = arith.constant 0 : i32
    %c0_i32_1 = arith.constant 0 : i32
    return %c0_i32, %c0_i32_0 : i32, i32
  }
  func.func @transform_2(%arg0: i32) -> (i32, i32) {
    %c0_i32 = arith.constant 0 : i32
    %c0_i32_0 = arith.constant 0 : i32
    %c0_i32_1 = arith.constant 0 : i32
    return %c0_i32, %c0_i32_0 : i32, i32
  }
  func.func @transform_3(%arg0: i32) -> (i32, i32) {
    %c0_i32 = arith.constant 0 : i32
    %c0_i32_0 = arith.constant 0 : i32
    %c0_i32_1 = arith.constant 0 : i32
    return %c0_i32, %c0_i32_0 : i32, i32
  }
  func.func @transform_4(%arg0: i32) -> (i32, i32) {
    %c0_i32 = arith.constant 0 : i32
    %c0_i32_0 = arith.constant 0 : i32
    %c0_i32_1 = arith.constant 0 : i32
    return %c0_i32, %c0_i32_0 : i32, i32
  }
  func.func @transform_5(%arg0: i32) -> (i32, i32) {
    %c0_i32 = arith.constant 0 : i32
    %c0_i32_0 = arith.constant 0 : i32
    %c0_i32_1 = arith.constant 0 : i32
    return %c0_i32, %c0_i32_0 : i32, i32
  }
  func.func @transform_6(%arg0: i32) -> (i32, i32, i32) {
    %c0_i32 = arith.constant 0 : i32
    %c0_i32_0 = arith.constant 0 : i32
    %c0_i32_1 = arith.constant 0 : i32
    return %arg0, %c0_i32, %c0_i32_0 : i32, i32, i32
  }
}

</mosaic_0001>

<llo_original>
// kernel: _forward_impl.1
$region0: #{_forward_impl.1}
  #allocation0 [shape = 'u32[]', space=smem, size = 0x4, offset = 0x4, fixed_abs, tag = 'smem constant byte address 0x4 - core index']
  #allocation1 [shape = 'u32[144,128]{1,0:T(1,128)}', space=vmem, size = 0x12000, scoped, tag = 'internal scratch']
  %s0 = inlined_call_operand.vmem [shape: bf16[8,4,768], index: 0, kind: input, shape index: {}]
  %s1 = inlined_call_operand.vmem [shape: bf16[768,128], index: 1, kind: input, shape index: {}]
  %s2 = inlined_call_operand.vmem [shape: f32[1,128], index: 2, kind: input, shape index: {}]
  %s3 = inlined_call_operand.vmem [shape: f32[1,128], index: 3, kind: input, shape index: {}]
  %s4 = inlined_call_operand.vmem [shape: bf16[128,512], index: 4, kind: input, shape index: {}]
  %s5 = inlined_call_operand.vmem [shape: bf16[512,128], index: 5, kind: input, shape index: {}]
  %s6 = inlined_call_operand.hbm [shape: f32[2,1,128], index: 6, kind: output, shape index: {}]
  %s7 = sld [smem:[#allocation0]]
  $region57: #{_forward_impl.1} parent=0
    _
  %s9 = ssub.s32 1, %s7
  %s10 = scalar_select 0, %s9, %s7
  $region1: #{_forward_impl.1} parent=0
    #allocation2 [shape = 'u8[1024]{0}', space=vmem, size = 0x400, scoped, tag = 'output window, operand 0']
    #allocation3 [shape = 's32[2]{0}', space=sflag, size = 0x8, scoped, tag = 'scoped memory for _forward_impl.1']
    %11 = vsyncpa [#allocation3], 0
    %s12 = scalar_lea.sflag [#allocation3], 1
    %13 = vsyncpa %s12, 0
    loop: start=0, step=1, limit=4
    $region2: #{_forward_impl.1} parent=1 // loop_pre_header
      _
    $region3: #{_forward_impl.1} parent=1 // loop_header
      %s15 = sphi 0, %s19
      %p16 = scmp.ge.s32.totalorder %s15, 4
      %s25 = sphi 0, %s27
      %s28 = sphi 0, %s25
      %s29 = sphi 0, %s28
      %s45 = sphi 0, %s29
      %s49 = sphi 0, %s49
      %s51 = sphi 0, %s49
      %s52 = sphi 0, %s51
      %s66 = sphi 0, %s52
      %s70 = sphi 0, %s70
      %s72 = sphi 0, %s70
      %s73 = sphi 0, %s72
      %s87 = sphi 0, %s73
      %s91 = sphi 0, %s91
      %s93 = sphi 0, %s91
      %s94 = sphi 0, %s93
      %s108 = sphi 0, %s94
      %s112 = sphi 0, %s112
      %s114 = sphi 0, %s112
      %s115 = sphi 0, %s114
      %s129 = sphi 0, %s115
      %s133 = sphi 0, %s133
      %s135 = sphi 0, %s133
      %s136 = sphi 0, %s135
      %s150 = sphi 0, %s136
      %s156 = sphi 0, %s158
      %s159 = sphi 0, %s156
      %s160 = sphi 0, %s159
      %s176 = sphi 0, %s160
    $region4: #{_forward_impl.1} parent=1 // loop_header_branch
      %18 = sbr.rel (%p16) target = $region8
    $region5: #{_forward_impl.1} parent=1 // loop_body
      %s20 = ssub.s32 %s15, 1
      %s21 = ssub.s32 %s15, 2
      %s22 = sadd.s32 %s15, 1
      %s23 = ssub.s32 %s15, %s22
      %p24 = scmp.eq.s32.totalorder %s23, 0
      %s26 = sadd.s32 %s25, 1
      %s27 = scalar_select %p24, %s25, %s26
      %p30 = pneg %p24
      %p31 = scmp.eq.s32.totalorder %s15, 1
      %p32 = por %p30, %p31
      %p33 = scmp.ne.s32.totalorder %s25, %s28
      %p34 = scmp.eq.s32.totalorder %s15, 0
      %p35 = por %p33, %p34
      %p36 = scmp.ne.s32.totalorder %s25, %s28
      %p37 = scmp.eq.s32.totalorder %s20, 1
      %p38 = por %p36, %p37
      %p39 = scmp.ne.s32.totalorder %s28, %s29
      %p40 = scmp.eq.s32.totalorder %s20, 0
      %p41 = por %p39, %p40
      %p42 = scmp.ne.s32.totalorder %s28, %s29
      %p43 = scmp.eq.s32.totalorder %s21, 1
      %p44 = por %p42, %p43
      %p46 = scmp.ne.s32.totalorder %s29, %s45
      %p47 = scmp.eq.s32.totalorder %s21, 0
      %p48 = por %p46, %p47
      %s50 = sadd.s32 %s49, 1
      %p53 = scmp.eq.s32.totalorder %s15, 1
      %p54 = scmp.ne.s32.totalorder %s49, %s51
      %p55 = scmp.eq.s32.totalorder %s15, 0
      %p56 = por %p54, %p55
      %p57 = scmp.ne.s32.totalorder %s49, %s51
      %p58 = scmp.eq.s32.totalorder %s20, 1
      %p59 = por %p57, %p58
      %p60 = scmp.ne.s32.totalorder %s51, %s52
      %p61 = scmp.eq.s32.totalorder %s20, 0
      %p62 = por %p60, %p61
      %p63 = scmp.ne.s32.totalorder %s51, %s52
      %p64 = scmp.eq.s32.totalorder %s21, 1
      %p65 = por %p63, %p64
      %p67 = scmp.ne.s32.totalorder %s52, %s66
      %p68 = scmp.eq.s32.totalorder %s21, 0
      %p69 = por %p67, %p68
      %s71 = sadd.s32 %s70, 1
      %p74 = scmp.eq.s32.totalorder %s15, 1
      %p75 = scmp.ne.s32.totalorder %s70, %s72
      %p76 = scmp.eq.s32.totalorder %s15, 0
      %p77 = por %p75, %p76
      %p78 = scmp.ne.s32.totalorder %s70, %s72
      %p79 = scmp.eq.s32.totalorder %s20, 1
      %p80 = por %p78, %p79
      %p81 = scmp.ne.s32.totalorder %s72, %s73
      %p82 = scmp.eq.s32.totalorder %s20, 0
      %p83 = por %p81, %p82
      %p84 = scmp.ne.s32.totalorder %s72, %s73
      %p85 = scmp.eq.s32.totalorder %s21, 1
      %p86 = por %p84, %p85
      %p88 = scmp.ne.s32.totalorder %s73, %s87
      %p89 = scmp.eq.s32.totalorder %s21, 0
      %p90 = por %p88, %p89
      %s92 = sadd.s32 %s91, 1
      %p95 = scmp.eq.s32.totalorder %s15, 1
      %p96 = scmp.ne.s32.totalorder %s91, %s93
      %p97 = scmp.eq.s32.totalorder %s15, 0
      %p98 = por %p96, %p97
      %p99 = scmp.ne.s32.totalorder %s91, %s93
      %p100 = scmp.eq.s32.totalorder %s20, 1
      %p101 = por %p99, %p100
      %p102 = scmp.ne.s32.totalorder %s93, %s94
      %p103 = scmp.eq.s32.totalorder %s20, 0
      %p104 = por %p102, %p103
      %p105 = scmp.ne.s32.totalorder %s93, %s94
      %p106 = scmp.eq.s32.totalorder %s21, 1
      %p107 = por %p105, %p106
      %p109 = scmp.ne.s32.totalorder %s94, %s108
      %p110 = scmp.eq.s32.totalorder %s21, 0
      %p111 = por %p109, %p110
      %s113 = sadd.s32 %s112, 1
      %p116 = scmp.eq.s32.totalorder %s15, 1
      %p117 = scmp.ne.s32.totalorder %s112, %s114
      %p118 = scmp.eq.s32.totalorder %s15, 0
      %p119 = por %p117, %p118
      %p120 = scmp.ne.s32.totalorder %s112, %s114
      %p121 = scmp.eq.s32.totalorder %s20, 1
      %p122 = por %p120, %p121
      %p123 = scmp.ne.s32.totalorder %s114, %s115
      %p124 = scmp.eq.s32.totalorder %s20, 0
      %p125 = por %p123, %p124
      %p126 = scmp.ne.s32.totalorder %s114, %s115
      %p127 = scmp.eq.s32.totalorder %s21, 1
      %p128 = por %p126, %p127
      %p130 = scmp.ne.s32.totalorder %s115, %s129
      %p131 = scmp.eq.s32.totalorder %s21, 0
      %p132 = por %p130, %p131
      %s134 = sadd.s32 %s133, 1
      %p137 = scmp.eq.s32.totalorder %s15, 1
      %p138 = scmp.ne.s32.totalorder %s133, %s135
      %p139 = scmp.eq.s32.totalorder %s15, 0
      %p140 = por %p138, %p139
      %p141 = scmp.ne.s32.totalorder %s133, %s135
      %p142 = scmp.eq.s32.totalorder %s20, 1
      %p143 = por %p141, %p142
      %p144 = scmp.ne.s32.totalorder %s135, %s136
      %p145 = scmp.eq.s32.totalorder %s20, 0
      %p146 = por %p144, %p145
      %p147 = scmp.ne.s32.totalorder %s135, %s136
      %p148 = scmp.eq.s32.totalorder %s21, 1
      %p149 = por %p147, %p148
      %p151 = scmp.ne.s32.totalorder %s136, %s150
      %p152 = scmp.eq.s32.totalorder %s21, 0
      %p153 = por %p151, %p152
      %s154 = ssub.s32 %s15, %s22
      %p155 = scmp.eq.s32.totalorder %s154, 0
      %s157 = sadd.s32 %s156, 1
      %s158 = scalar_select %p155, %s156, %s157
      %p161 = pneg %p155
      %p162 = scmp.eq.s32.totalorder %s15, 1
      %p163 = por %p161, %p162
      %p164 = scmp.ne.s32.totalorder %s156, %s159
      %p165 = scmp.eq.s32.totalorder %s15, 0
      %p166 = por %p164, %p165
      %p167 = scmp.ne.s32.totalorder %s156, %s159
      %p168 = scmp.eq.s32.totalorder %s20, 1
      %p169 = por %p167, %p168
      %p170 = scmp.ne.s32.totalorder %s159, %s160
      %p171 = scmp.eq.s32.totalorder %s20, 0
      %p172 = por %p170, %p171
      %p173 = scmp.ne.s32.totalorder %s159, %s160
      %p174 = scmp.eq.s32.totalorder %s21, 1
      %p175 = por %p173, %p174
      %p177 = scmp.ne.s32.totalorder %s160, %s176
      %p178 = scmp.eq.s32.totalorder %s21, 0
      %p179 = por %p177, %p178
      %p180 = scmp.le.s32.totalorder 1, %s15
      %p181 = scmp.lt.s32.totalorder %s15, 3
      %p182 = pnand %p180, %p181
      %p183 = pneg %p182
      // Predicated region
      $region9: #{_forward_impl.1} parent=5 // pred_check
        _
      $region10: #{_forward_impl.1} parent=5 // pred_check_branch
        %185 = sbr.rel (%p182) target = $region12
      $region11: #{_forward_impl.1} parent=5 // pred_region
        %s186 = ssub.s32 %s15, 1
        // Predicated region
        $region13: #{_forward_impl.1} parent=11 // pred_check
          %p187 = pneg %p62
        $region14: #{_forward_impl.1} parent=11 // pred_check_branch
          %189 = sbr.rel (%p187) target = $region16
        $region15: #{_forward_impl.1} parent=11 // pred_region
          _
        $region16: #{_forward_impl.1} parent=11 // pred_fallthru
          _
        // Predicated region
        $region17: #{_forward_impl.1} parent=11 // pred_check
          %p190 = pneg %p83
        $region18: #{_forward_impl.1} parent=11 // pred_check_branch
          %192 = sbr.rel (%p190) target = $region20
        $region19: #{_forward_impl.1} parent=11 // pred_region
          _
        $region20: #{_forward_impl.1} parent=11 // pred_fallthru
          _
        // Predicated region
        $region21: #{_forward_impl.1} parent=11 // pred_check
          %p193 = pneg %p104
        $region22: #{_forward_impl.1} parent=11 // pred_check_branch
          %195 = sbr.rel (%p193) target = $region24
        $region23: #{_forward_impl.1} parent=11 // pred_region
          _
        $region24: #{_forward_impl.1} parent=11 // pred_fallthru
          _
        // Predicated region
        $region25: #{_forward_impl.1} parent=11 // pred_check
          %p196 = pneg %p125
        $region26: #{_forward_impl.1} parent=11 // pred_check_branch
          %198 = sbr.rel (%p196) target = $region28
        $region27: #{_forward_impl.1} parent=11 // pred_region
          _
        $region28: #{_forward_impl.1} parent=11 // pred_fallthru
          _
        // Predicated region
        $region29: #{_forward_impl.1} parent=11 // pred_check
          %p199 = pneg %p146
        $region30: #{_forward_impl.1} parent=11 // pred_check_branch
          %201 = sbr.rel (%p199) target = $region32
        $region31: #{_forward_impl.1} parent=11 // pred_region
          _
        $region32: #{_forward_impl.1} parent=11 // pred_fallthru
          _
      $region12: #{_forward_impl.1} parent=5 // pred_fallthru
        _
      %p202 = scmp.lt.s32.totalorder %s15, 2
      // Predicated region
      $region33: #{_forward_impl.1} parent=5 // pred_check
        %p203 = pneg %p202
      $region34: #{_forward_impl.1} parent=5 // pred_check_branch
        %205 = sbr.rel (%p203) target = $region36
      $region35: #{_forward_impl.1} parent=5 // pred_region
        // Predicated region
        $region37: #{_forward_impl.1} parent=35 // pred_check
          %p206 = pneg %p35
        $region38: #{_forward_impl.1} parent=35 // pred_check_branch
          %208 = sbr.rel (%p206) target = $region40
        $region39: #{_forward_impl.1} parent=35 // pred_region
          %s209 = smul.u32 4, %s15
          %p210 = scmp.lt.s32.totalorder %s209, 7
          %s211 = scalar_select %p210, %s209, 7
          %s212 = smul.addr %s211, 6
          %s213 = smul.addr %s212, 2
          %s214 = scalar_lea.vmem %s0, %s213
          %s215 = smul.u32 4, %s15
        $region40: #{_forward_impl.1} parent=35 // pred_fallthru
          _
      $region36: #{_forward_impl.1} parent=5 // pred_fallthru
        _
      %p216 = scmp.le.s32.totalorder 1, %s15
      %p217 = scmp.lt.s32.totalorder %s15, 3
      %p218 = pnand %p216, %p217
      %p219 = pneg %p218
      // Predicated region
      $region41: #{_forward_impl.1} parent=5 // pred_check
        _
      $region42: #{_forward_impl.1} parent=5 // pred_check_branch
        %221 = sbr.rel (%p218) target = $region44
      $region43: #{_forward_impl.1} parent=5 // pred_region
        %s222 = ssub.s32 %s15, 1
        %s223 = smul.u32 4, %s20
        %p224 = scmp.lt.s32.totalorder %s223, 7
        %s225 = scalar_select %p224, %s223, 7
        %s226 = smul.addr %s225, 6
        %s227 = smul.addr %s226, 2
        %s228 = scalar_lea.vmem %s0, %s227
        %p229 = pneg %p41
        %p230 = pneg %p38
        %p231 = pneg %p62
        %p232 = pneg %p59
        %p233 = pneg %p83
        %p234 = pneg %p80
        %p235 = pneg %p104
        %p236 = pneg %p101
        %p237 = pneg %p125
        %p238 = pneg %p122
        %p239 = pneg %p146
        %p240 = pneg %p143
        %p241 = pneg %p172
        %p242 = pneg %p169
        %s243 = sand.u32 %s159, 1
        %s244 = scalar_lea.sflag [#allocation3], %s243
        %s245 = sand.u32 %s159, 1
        %s246 = scalar_lea.vmem [#allocation2], %s245
        %s247 = smul.u32 4, %s20
        %p248 = scmp.lt.s32.totalorder %s247, 7
        %s249 = scalar_select %p248, %s247, 7
        %s250 = smul.addr %s249, 6
        %s251 = smul.addr %s250, 2
        %s252 = scalar_lea.vmem %s0, %s251
        %s253 = smul.u32 4, %s20
        %v255 = vld [vmem:[%s252] sm:$0xff]
        %v256 = vld [vmem:[%s252 + $0x8] sm:$0xf]
        %v257 = vld [vmem:[%s252 + $0xc] sm:$0xff]
        %v258 = vld [vmem:[%s252 + $0x14] sm:$0xf]
        %v259 = vld [vmem:[%s252 + $0x18] sm:$0xff]
        %v260 = vld [vmem:[%s252 + $0x20] sm:$0xf]
        %v261 = vld [vmem:[%s252 + $0x24] sm:$0xff]
        %v262 = vld [vmem:[%s252 + $0x2c] sm:$0xf]
        %v263 = vunpack.c.l.bf16 %v255
        %v264 = vunpack.c.h.bf16 %v255
        %v265 = vunpack.c.l.bf16 %v256
        %v266 = vunpack.c.l.bf16 %v257
        %v267 = vunpack.c.h.bf16 %v257
        %v268 = vunpack.c.l.bf16 %v258
        %v269 = vunpack.c.l.bf16 %v259
        %v270 = vunpack.c.h.bf16 %v259
        %v271 = vunpack.c.l.bf16 %v260
        %v272 = vunpack.c.l.bf16 %v261
        %v273 = vunpack.c.h.bf16 %v261
        %v274 = vunpack.c.l.bf16 %v262
        %v287 = vcombine.high %v263, %v263
        %v288 = vcombine.high %v264, %v264
        %v289 = vcombine.high %v265, %v265
        %v290 = vcombine.high %v266, %v266
        %v291 = vcombine.high %v267, %v267
        %v292 = vcombine.high %v268, %v268
        %v293 = vcombine.high %v269, %v269
        %v294 = vcombine.high %v270, %v270
        %v295 = vcombine.high %v271, %v271
        %v296 = vcombine.high %v272, %v272
        %v297 = vcombine.high %v273, %v273
        %v298 = vcombine.high %v274, %v274
        %vm311 = vcmask 1043456
        %v312 = vsel %vm311, %v263, 0.0
        %v313 = vrot.slane %v312, 4
        %v314 = vadd.f32 %v312, %v313
        %v315 = vrot.slane %v314, 2
        %v316 = vadd.f32 %v314, %v315
        %v317 = vrot.slane %v316, 1
        %v318 = vadd.f32 %v316, %v317
        %v319 = vsel %vm311, %v287, 0.0
        %v320 = vrot.slane %v319, 4
        %v321 = vadd.f32 %v319, %v320
        %v322 = vrot.slane %v321, 2
        %v323 = vadd.f32 %v321, %v322
        %v324 = vrot.slane %v323, 1
        %v325 = vadd.f32 %v323, %v324
        %v326 = vsel %vm311, %v264, 0.0
        %v327 = vrot.slane %v326, 4
        %v328 = vadd.f32 %v326, %v327
        %v329 = vrot.slane %v328, 2
        %v330 = vadd.f32 %v328, %v329
        %v331 = vrot.slane %v330, 1
        %v332 = vadd.f32 %v330, %v331
        %v333 = vsel %vm311, %v288, 0.0
        %v334 = vrot.slane %v333, 4
        %v335 = vadd.f32 %v333, %v334
        %v336 = vrot.slane %v335, 2
        %v337 = vadd.f32 %v335, %v336
        %v338 = vrot.slane %v337, 1
        %v339 = vadd.f32 %v337, %v338
        %v340 = vsel %vm311, %v265, 0.0
        %v341 = vrot.slane %v340, 4
        %v342 = vadd.f32 %v340, %v341
        %v343 = vrot.slane %v342, 2
        %v344 = vadd.f32 %v342, %v343
        %v345 = vrot.slane %v344, 1
        %v346 = vadd.f32 %v344, %v345
        %v347 = vsel %vm311, %v289, 0.0
        %v348 = vrot.slane %v347, 4
        %v349 = vadd.f32 %v347, %v348
        %v350 = vrot.slane %v349, 2
        %v351 = vadd.f32 %v349, %v350
        %v352 = vrot.slane %v351, 1
        %v353 = vadd.f32 %v351, %v352
        %v354 = vsel %vm311, %v266, 0.0
        %v355 = vrot.slane %v354, 4
        %v356 = vadd.f32 %v354, %v355
        %v357 = vrot.slane %v356, 2
        %v358 = vadd.f32 %v356, %v357
        %v359 = vrot.slane %v358, 1
        %v360 = vadd.f32 %v358, %v359
        %v361 = vsel %vm311, %v290, 0.0
        %v362 = vrot.slane %v361, 4
        %v363 = vadd.f32 %v361, %v362
        %v364 = vrot.slane %v363, 2
        %v365 = vadd.f32 %v363, %v364
        %v366 = vrot.slane %v365, 1
        %v367 = vadd.f32 %v365, %v366
        %v368 = vsel %vm311, %v267, 0.0
        %v369 = vrot.slane %v368, 4
        %v370 = vadd.f32 %v368, %v369
        %v371 = vrot.slane %v370, 2
        %v372 = vadd.f32 %v370, %v371
        %v373 = vrot.slane %v372, 1
        %v374 = vadd.f32 %v372, %v373
        %v375 = vsel %vm311, %v291, 0.0
        %v376 = vrot.slane %v375, 4
        %v377 = vadd.f32 %v375, %v376
        %v378 = vrot.slane %v377, 2
        %v379 = vadd.f32 %v377, %v378
        %v380 = vrot.slane %v379, 1
        %v381 = vadd.f32 %v379, %v380
        %v382 = vsel %vm311, %v268, 0.0
        %v383 = vrot.slane %v382, 4
        %v384 = vadd.f32 %v382, %v383
        %v385 = vrot.slane %v384, 2
        %v386 = vadd.f32 %v384, %v385
        %v387 = vrot.slane %v386, 1
        %v388 = vadd.f32 %v386, %v387
        %v389 = vsel %vm311, %v292, 0.0
        %v390 = vrot.slane %v389, 4
        %v391 = vadd.f32 %v389, %v390
        %v392 = vrot.slane %v391, 2
        %v393 = vadd.f32 %v391, %v392
        %v394 = vrot.slane %v393, 1
        %v395 = vadd.f32 %v393, %v394
        %v396 = vsel %vm311, %v269, 0.0
        %v397 = vrot.slane %v396, 4
        %v398 = vadd.f32 %v396, %v397
        %v399 = vrot.slane %v398, 2
        %v400 = vadd.f32 %v398, %v399
        %v401 = vrot.slane %v400, 1
        %v402 = vadd.f32 %v400, %v401
        %v403 = vsel %vm311, %v293, 0.0
        %v404 = vrot.slane %v403, 4
        %v405 = vadd.f32 %v403, %v404
        %v406 = vrot.slane %v405, 2
        %v407 = vadd.f32 %v405, %v406
        %v408 = vrot.slane %v407, 1
        %v409 = vadd.f32 %v407, %v408
        %v410 = vsel %vm311, %v270, 0.0
        %v411 = vrot.slane %v410, 4
        %v412 = vadd.f32 %v410, %v411
        %v413 = vrot.slane %v412, 2
        %v414 = vadd.f32 %v412, %v413
        %v415 = vrot.slane %v414, 1
        %v416 = vadd.f32 %v414, %v415
        %v417 = vsel %vm311, %v294, 0.0
        %v418 = vrot.slane %v417, 4
        %v419 = vadd.f32 %v417, %v418
        %v420 = vrot.slane %v419, 2
        %v421 = vadd.f32 %v419, %v420
        %v422 = vrot.slane %v421, 1
        %v423 = vadd.f32 %v421, %v422
        %v424 = vsel %vm311, %v271, 0.0
        %v425 = vrot.slane %v424, 4
        %v426 = vadd.f32 %v424, %v425
        %v427 = vrot.slane %v426, 2
        %v428 = vadd.f32 %v426, %v427
        %v429 = vrot.slane %v428, 1
        %v430 = vadd.f32 %v428, %v429
        %v431 = vsel %vm311, %v295, 0.0
        %v432 = vrot.slane %v431, 4
        %v433 = vadd.f32 %v431, %v432
        %v434 = vrot.slane %v433, 2
        %v435 = vadd.f32 %v433, %v434
        %v436 = vrot.slane %v435, 1
        %v437 = vadd.f32 %v435, %v436
        %v438 = vsel %vm311, %v272, 0.0
        %v439 = vrot.slane %v438, 4
        %v440 = vadd.f32 %v438, %v439
        %v441 = vrot.slane %v440, 2
        %v442 = vadd.f32 %v440, %v441
        %v443 = vrot.slane %v442, 1
        %v444 = vadd.f32 %v442, %v443
        %v445 = vsel %vm311, %v296, 0.0
        %v446 = vrot.slane %v445, 4
        %v447 = vadd.f32 %v445, %v446
        %v448 = vrot.slane %v447, 2
        %v449 = vadd.f32 %v447, %v448
        %v450 = vrot.slane %v449, 1
        %v451 = vadd.f32 %v449, %v450
        %v452 = vsel %vm311, %v273, 0.0
        %v453 = vrot.slane %v452, 4
        %v454 = vadd.f32 %v452, %v453
        %v455 = vrot.slane %v454, 2
        %v456 = vadd.f32 %v454, %v455
        %v457 = vrot.slane %v456, 1
        %v458 = vadd.f32 %v456, %v457
        %v459 = vsel %vm311, %v297, 0.0
        %v460 = vrot.slane %v459, 4
        %v461 = vadd.f32 %v459, %v460
        %v462 = vrot.slane %v461, 2
        %v463 = vadd.f32 %v461, %v462
        %v464 = vrot.slane %v463, 1
        %v465 = vadd.f32 %v463, %v464
        %v466 = vsel %vm311, %v274, 0.0
        %v467 = vrot.slane %v466, 4
        %v468 = vadd.f32 %v466, %v467
        %v469 = vrot.slane %v468, 2
        %v470 = vadd.f32 %v468, %v469
        %v471 = vrot.slane %v470, 1
        %v472 = vadd.f32 %v470, %v471
        %v473 = vsel %vm311, %v298, 0.0
        %v474 = vrot.slane %v473, 4
        %v475 = vadd.f32 %v473, %v474
        %v476 = vrot.slane %v475, 2
        %v477 = vadd.f32 %v475, %v476
        %v478 = vrot.slane %v477, 1
        %v479 = vadd.f32 %v477, %v478
        %v480 = vrcp.pop 4.0
        %v481 = vmul.f32 %v318, %v480
        %v482 = vmul.f32 %v325, %v480
        %v483 = vmul.f32 %v332, %v480
        %v484 = vmul.f32 %v339, %v480
        %v485 = vmul.f32 %v346, %v480
        %v486 = vmul.f32 %v353, %v480
        %v487 = vmul.f32 %v360, %v480
        %v488 = vmul.f32 %v367, %v480
        %v489 = vmul.f32 %v374, %v480
        %v490 = vmul.f32 %v381, %v480
        %v491 = vmul.f32 %v388, %v480
        %v492 = vmul.f32 %v395, %v480
        %v493 = vmul.f32 %v402, %v480
        %v494 = vmul.f32 %v409, %v480
        %v495 = vmul.f32 %v416, %v480
        %v496 = vmul.f32 %v423, %v480
        %v497 = vmul.f32 %v430, %v480
        %v498 = vmul.f32 %v437, %v480
        %v499 = vmul.f32 %v444, %v480
        %v500 = vmul.f32 %v451, %v480
        %v501 = vmul.f32 %v458, %v480
        %v502 = vmul.f32 %v465, %v480
        %v503 = vmul.f32 %v472, %v480
        %v504 = vmul.f32 %v479, %v480
        %v505 = vpack.c.bf16 %v481, %v481
        %v506 = vpack.c.bf16 %v482, %v482
        %v507 = vpack.c.bf16 %v483, %v483
        %v508 = vpack.c.bf16 %v484, %v484
        %v509 = vpack.c.bf16 %v485, %v485
        %v510 = vpack.c.bf16 %v486, %v486
        %v511 = vpack.c.bf16 %v487, %v487
        %v512 = vpack.c.bf16 %v488, %v488
        %v513 = vpack.c.bf16 %v489, %v489
        %v514 = vpack.c.bf16 %v490, %v490
        %v515 = vpack.c.bf16 %v491, %v491
        %v516 = vpack.c.bf16 %v492, %v492
        %v517 = vpack.c.bf16 %v493, %v493
        %v518 = vpack.c.bf16 %v494, %v494
        %v519 = vpack.c.bf16 %v495, %v495
        %v520 = vpack.c.bf16 %v496, %v496
        %v521 = vpack.c.bf16 %v497, %v497
        %v522 = vpack.c.bf16 %v498, %v498
        %v523 = vpack.c.bf16 %v499, %v499
        %v524 = vpack.c.bf16 %v500, %v500
        %v525 = vpack.c.bf16 %v501, %v501
        %v526 = vpack.c.bf16 %v502, %v502
        %v527 = vpack.c.bf16 %v503, %v503
        %v528 = vpack.c.bf16 %v504, %v504
        %v529 = vld [vmem:[%s1] sm:$0xf]
        %v530 = vld [vmem:[%s1 + $0x4] sm:$0xf]
        %v531 = vld [vmem:[%s1 + $0x8] sm:$0xf]
        %v532 = vld [vmem:[%s1 + $0xc] sm:$0xf]
        %v533 = vld [vmem:[%s1 + $0x10] sm:$0xf]
        %v534 = vld [vmem:[%s1 + $0x14] sm:$0xf]
        %v535 = vld [vmem:[%s1 + $0x18] sm:$0xf]
        %v536 = vld [vmem:[%s1 + $0x1c] sm:$0xf]
        %v537 = vld [vmem:[%s1 + $0x20] sm:$0xf]
        %v538 = vld [vmem:[%s1 + $0x24] sm:$0xf]
        %v539 = vld [vmem:[%s1 + $0x28] sm:$0xf]
        %v540 = vld [vmem:[%s1 + $0x2c] sm:$0xf]
        %v541 = vld [vmem:[%s1 + $0x30] sm:$0xf]
        %v542 = vld [vmem:[%s1 + $0x34] sm:$0xf]
        %v543 = vld [vmem:[%s1 + $0x38] sm:$0xf]
        %v544 = vld [vmem:[%s1 + $0x3c] sm:$0xf]
        %v545 = vld [vmem:[%s1 + $0x40] sm:$0xf]
        %v546 = vld [vmem:[%s1 + $0x44] sm:$0xf]
        %v547 = vld [vmem:[%s1 + $0x48] sm:$0xf]
        %v548 = vld [vmem:[%s1 + $0x4c] sm:$0xf]
        %v549 = vld [vmem:[%s1 + $0x50] sm:$0xf]
        %v550 = vld [vmem:[%s1 + $0x54] sm:$0xf]
        %v551 = vld [vmem:[%s1 + $0x58] sm:$0xf]
        %v552 = vld [vmem:[%s1 + $0x5c] sm:$0xf]
        %v553 = vld [vmem:[%s1 + $0x60] sm:$0xf]
        %v554 = vld [vmem:[%s1 + $0x64] sm:$0xf]
        %v555 = vld [vmem:[%s1 + $0x68] sm:$0xf]
        %v556 = vld [vmem:[%s1 + $0x6c] sm:$0xf]
        %v557 = vld [vmem:[%s1 + $0x70] sm:$0xf]
        %v558 = vld [vmem:[%s1 + $0x74] sm:$0xf]
        %v559 = vld [vmem:[%s1 + $0x78] sm:$0xf]
        %v560 = vld [vmem:[%s1 + $0x7c] sm:$0xf]
        %v561 = vld [vmem:[%s1 + $0x80] sm:$0xf]
        %v562 = vld [vmem:[%s1 + $0x84] sm:$0xf]
        %v563 = vld [vmem:[%s1 + $0x88] sm:$0xf]
        %v564 = vld [vmem:[%s1 + $0x8c] sm:$0xf]
        %v565 = vld [vmem:[%s1 + $0x90] sm:$0xf]
        %v566 = vld [vmem:[%s1 + $0x94] sm:$0xf]
        %v567 = vld [vmem:[%s1 + $0x98] sm:$0xf]
        %v568 = vld [vmem:[%s1 + $0x9c] sm:$0xf]
        %v569 = vld [vmem:[%s1 + $0xa0] sm:$0xf]
        %v570 = vld [vmem:[%s1 + $0xa4] sm:$0xf]
        %v571 = vld [vmem:[%s1 + $0xa8] sm:$0xf]
        %v572 = vld [vmem:[%s1 + $0xac] sm:$0xf]
        %v573 = vld [vmem:[%s1 + $0xb0] sm:$0xf]
        %v574 = vld [vmem:[%s1 + $0xb4] sm:$0xf]
        %v575 = vld [vmem:[%s1 + $0xb8] sm:$0xf]
        %v576 = vld [vmem:[%s1 + $0xbc] sm:$0xf]
        %v577 = vld [vmem:[%s1 + $0xc0] sm:$0xf]
        %v578 = vld [vmem:[%s1 + $0xc4] sm:$0xf]
        %v579 = vld [vmem:[%s1 + $0xc8] sm:$0xf]
        %v580 = vld [vmem:[%s1 + $0xcc] sm:$0xf]
        %v581 = vld [vmem:[%s1 + $0xd0] sm:$0xf]
        %v582 = vld [vmem:[%s1 + $0xd4] sm:$0xf]
        %v583 = vld [vmem:[%s1 + $0xd8] sm:$0xf]
        %v584 = vld [vmem:[%s1 + $0xdc] sm:$0xf]
        %v585 = vld [vmem:[%s1 + $0xe0] sm:$0xf]
        %v586 = vld [vmem:[%s1 + $0xe4] sm:$0xf]
        %v587 = vld [vmem:[%s1 + $0xe8] sm:$0xf]
        %v588 = vld [vmem:[%s1 + $0xec] sm:$0xf]
        %v589 = vld [vmem:[%s1 + $0xf0] sm:$0xf]
        %v590 = vld [vmem:[%s1 + $0xf4] sm:$0xf]
        %v591 = vld [vmem:[%s1 + $0xf8] sm:$0xf]
        %v592 = vld [vmem:[%s1 + $0xfc] sm:$0xf]
        %v593 = vld [vmem:[%s1 + $0x100] sm:$0xf]
        %v594 = vld [vmem:[%s1 + $0x104] sm:$0xf]
        %v595 = vld [vmem:[%s1 + $0x108] sm:$0xf]
        %v596 = vld [vmem:[%s1 + $0x10c] sm:$0xf]
        %v597 = vld [vmem:[%s1 + $0x110] sm:$0xf]
        %v598 = vld [vmem:[%s1 + $0x114] sm:$0xf]
        %v599 = vld [vmem:[%s1 + $0x118] sm:$0xf]
        %v600 = vld [vmem:[%s1 + $0x11c] sm:$0xf]
        %v601 = vld [vmem:[%s1 + $0x120] sm:$0xf]
        %v602 = vld [vmem:[%s1 + $0x124] sm:$0xf]
        %v603 = vld [vmem:[%s1 + $0x128] sm:$0xf]
        %v604 = vld [vmem:[%s1 + $0x12c] sm:$0xf]
        %v605 = vld [vmem:[%s1 + $0x130] sm:$0xf]
        %v606 = vld [vmem:[%s1 + $0x134] sm:$0xf]
        %v607 = vld [vmem:[%s1 + $0x138] sm:$0xf]
        %v608 = vld [vmem:[%s1 + $0x13c] sm:$0xf]
        %v609 = vld [vmem:[%s1 + $0x140] sm:$0xf]
        %v610 = vld [vmem:[%s1 + $0x144] sm:$0xf]
        %v611 = vld [vmem:[%s1 + $0x148] sm:$0xf]
        %v612 = vld [vmem:[%s1 + $0x14c] sm:$0xf]
        %v613 = vld [vmem:[%s1 + $0x150] sm:$0xf]
        %v614 = vld [vmem:[%s1 + $0x154] sm:$0xf]
        %v615 = vld [vmem:[%s1 + $0x158] sm:$0xf]
        %v616 = vld [vmem:[%s1 + $0x15c] sm:$0xf]
        %v617 = vld [vmem:[%s1 + $0x160] sm:$0xf]
        %v618 = vld [vmem:[%s1 + $0x164] sm:$0xf]
        %v619 = vld [vmem:[%s1 + $0x168] sm:$0xf]
        %v620 = vld [vmem:[%s1 + $0x16c] sm:$0xf]
        %v621 = vld [vmem:[%s1 + $0x170] sm:$0xf]
        %v622 = vld [vmem:[%s1 + $0x174] sm:$0xf]
        %v623 = vld [vmem:[%s1 + $0x178] sm:$0xf]
        %v624 = vld [vmem:[%s1 + $0x17c] sm:$0xf]
        %v649 = vunpack.c.l.b16 %v505
        %v650 = vunpack.c.l.b16 %v506
        %v651 = vunpack.c.l.b16 %v507
        %v652 = vunpack.c.l.b16 %v508
        %v653 = vunpack.c.l.b16 %v509
        %v654 = vunpack.c.l.b16 %v510
        %v655 = vunpack.c.l.b16 %v511
        %v656 = vunpack.c.l.b16 %v512
        %v657 = vunpack.c.l.b16 %v513
        %v658 = vunpack.c.l.b16 %v514
        %v659 = vunpack.c.l.b16 %v515
        %v660 = vunpack.c.l.b16 %v516
        %v661 = vunpack.c.l.b16 %v517
        %v662 = vunpack.c.l.b16 %v518
        %v663 = vunpack.c.l.b16 %v519
        %v664 = vunpack.c.l.b16 %v520
        %v665 = vunpack.c.l.b16 %v521
        %v666 = vunpack.c.l.b16 %v522
        %v667 = vunpack.c.l.b16 %v523
        %v668 = vunpack.c.l.b16 %v524
        %v669 = vunpack.c.l.b16 %v525
        %v670 = vunpack.c.l.b16 %v526
        %v671 = vunpack.c.l.b16 %v527
        %v672 = vunpack.c.l.b16 %v528
        %vm673 = vcmask 1041409
        %v674 = vsel %vm673, %v655, %v649
        %vm675 = vcmask 1042434
        %v676 = vsel %vm675, %v661, %v674
        %vm677 = vcmask 1043459
        %v678 = vsel %vm677, %v667, %v676
        %v679 = vsel %vm673, %v656, %v650
        %v680 = vsel %vm675, %v662, %v679
        %v681 = vsel %vm677, %v668, %v680
        %v682 = vsel %vm673, %v657, %v651
        %v683 = vsel %vm675, %v663, %v682
        %v684 = vsel %vm677, %v669, %v683
        %v685 = vsel %vm673, %v658, %v652
        %v686 = vsel %vm675, %v664, %v685
        %v687 = vsel %vm677, %v670, %v686
        %v688 = vsel %vm673, %v659, %v653
        %v689 = vsel %vm675, %v665, %v688
        %v690 = vsel %vm677, %v671, %v689
        %v691 = vsel %vm673, %v660, %v654
        %v692 = vsel %vm675, %v666, %v691
        %v693 = vsel %vm677, %v672, %v692
        %v694 = vpack.c.b16 %v678, %v678
        %v695 = vpack.c.b16 %v681, %v681
        %v696 = vpack.c.b16 %v684, %v684
        %v697 = vpack.c.b16 %v687, %v687
        %v698 = vpack.c.b16 %v690, %v690
        %v699 = vpack.c.b16 %v693, %v693
        %v802 = vunpack.c.l.b16 %v529
        %v803 = vunpack.c.l.b16 %v530
        %v804 = vunpack.c.l.b16 %v531
        %v805 = vunpack.c.l.b16 %v532
        %v806 = vunpack.c.l.b16 %v533
        %v807 = vunpack.c.l.b16 %v534
        %v808 = vunpack.c.l.b16 %v535
        %v809 = vunpack.c.l.b16 %v536
        %v810 = vunpack.c.l.b16 %v537
        %v811 = vunpack.c.l.b16 %v538
        %v812 = vunpack.c.l.b16 %v539
        %v813 = vunpack.c.l.b16 %v540
        %v814 = vunpack.c.l.b16 %v541
        %v815 = vunpack.c.l.b16 %v542
        %v816 = vunpack.c.l.b16 %v543
        %v817 = vunpack.c.l.b16 %v544
        %v818 = vunpack.c.l.b16 %v545
        %v819 = vunpack.c.l.b16 %v546
        %v820 = vunpack.c.l.b16 %v547
        %v821 = vunpack.c.l.b16 %v548
        %v822 = vunpack.c.l.b16 %v549
        %v823 = vunpack.c.l.b16 %v550
        %v824 = vunpack.c.l.b16 %v551
        %v825 = vunpack.c.l.b16 %v552
        %v826 = vunpack.c.l.b16 %v553
        %v827 = vunpack.c.l.b16 %v554
        %v828 = vunpack.c.l.b16 %v555
        %v829 = vunpack.c.l.b16 %v556
        %v830 = vunpack.c.l.b16 %v557
        %v831 = vunpack.c.l.b16 %v558
        %v832 = vunpack.c.l.b16 %v559
        %v833 = vunpack.c.l.b16 %v560
        %v834 = vunpack.c.l.b16 %v561
        %v835 = vunpack.c.l.b16 %v562
        %v836 = vunpack.c.l.b16 %v563
        %v837 = vunpack.c.l.b16 %v564
        %v838 = vunpack.c.l.b16 %v565
        %v839 = vunpack.c.l.b16 %v566
        %v840 = vunpack.c.l.b16 %v567
        %v841 = vunpack.c.l.b16 %v568
        %v842 = vunpack.c.l.b16 %v569
        %v843 = vunpack.c.l.b16 %v570
        %v844 = vunpack.c.l.b16 %v571
        %v845 = vunpack.c.l.b16 %v572
        %v846 = vunpack.c.l.b16 %v573
        %v847 = vunpack.c.l.b16 %v574
        %v848 = vunpack.c.l.b16 %v575
        %v849 = vunpack.c.l.b16 %v576
        %v850 = vunpack.c.l.b16 %v577
        %v851 = vunpack.c.l.b16 %v578
        %v852 = vunpack.c.l.b16 %v579
        %v853 = vunpack.c.l.b16 %v580
        %v854 = vunpack.c.l.b16 %v581
        %v855 = vunpack.c.l.b16 %v582
        %v856 = vunpack.c.l.b16 %v583
        %v857 = vunpack.c.l.b16 %v584
        %v858 = vunpack.c.l.b16 %v585
        %v859 = vunpack.c.l.b16 %v586
        %v860 = vunpack.c.l.b16 %v587
        %v861 = vunpack.c.l.b16 %v588
        %v862 = vunpack.c.l.b16 %v589
        %v863 = vunpack.c.l.b16 %v590
        %v864 = vunpack.c.l.b16 %v591
        %v865 = vunpack.c.l.b16 %v592
        %v866 = vunpack.c.l.b16 %v593
        %v867 = vunpack.c.l.b16 %v594
        %v868 = vunpack.c.l.b16 %v595
        %v869 = vunpack.c.l.b16 %v596
        %v870 = vunpack.c.l.b16 %v597
        %v871 = vunpack.c.l.b16 %v598
        %v872 = vunpack.c.l.b16 %v599
        %v873 = vunpack.c.l.b16 %v600
        %v874 = vunpack.c.l.b16 %v601
        %v875 = vunpack.c.l.b16 %v602
        %v876 = vunpack.c.l.b16 %v603
        %v877 = vunpack.c.l.b16 %v604
        %v878 = vunpack.c.l.b16 %v605
        %v879 = vunpack.c.l.b16 %v606
        %v880 = vunpack.c.l.b16 %v607
        %v881 = vunpack.c.l.b16 %v608
        %v882 = vunpack.c.l.b16 %v609
        %v883 = vunpack.c.l.b16 %v610
        %v884 = vunpack.c.l.b16 %v611
        %v885 = vunpack.c.l.b16 %v612
        %v886 = vunpack.c.l.b16 %v613
        %v887 = vunpack.c.l.b16 %v614
        %v888 = vunpack.c.l.b16 %v615
        %v889 = vunpack.c.l.b16 %v616
        %v890 = vunpack.c.l.b16 %v617
        %v891 = vunpack.c.l.b16 %v618
        %v892 = vunpack.c.l.b16 %v619
        %v893 = vunpack.c.l.b16 %v620
        %v894 = vunpack.c.l.b16 %v621
        %v895 = vunpack.c.l.b16 %v622
        %v896 = vunpack.c.l.b16 %v623
        %v897 = vunpack.c.l.b16 %v624
        %v898 = vpack.c.b16 %v803, %v802
        %v899 = vpack.c.b16 %v805, %v804
        %v900 = vpack.c.b16 %v807, %v806
        %v901 = vpack.c.b16 %v809, %v808
        %v902 = vpack.c.b16 %v811, %v810
        %v903 = vpack.c.b16 %v813, %v812
        %v904 = vpack.c.b16 %v815, %v814
        %v905 = vpack.c.b16 %v817, %v816
        %v906 = vpack.c.b16 %v819, %v818
        %v907 = vpack.c.b16 %v821, %v820
        %v908 = vpack.c.b16 %v823, %v822
        %v909 = vpack.c.b16 %v825, %v824
        %v910 = vpack.c.b16 %v827, %v826
        %v911 = vpack.c.b16 %v829, %v828
        %v912 = vpack.c.b16 %v831, %v830
        %v913 = vpack.c.b16 %v833, %v832
        %v914 = vpack.c.b16 %v835, %v834
        %v915 = vpack.c.b16 %v837, %v836
        %v916 = vpack.c.b16 %v839, %v838
        %v917 = vpack.c.b16 %v841, %v840
        %v918 = vpack.c.b16 %v843, %v842
        %v919 = vpack.c.b16 %v845, %v844
        %v920 = vpack.c.b16 %v847, %v846
        %v921 = vpack.c.b16 %v849, %v848
        %v922 = vpack.c.b16 %v851, %v850
        %v923 = vpack.c.b16 %v853, %v852
        %v924 = vpack.c.b16 %v855, %v854
        %v925 = vpack.c.b16 %v857, %v856
        %v926 = vpack.c.b16 %v859, %v858
        %v927 = vpack.c.b16 %v861, %v860
        %v928 = vpack.c.b16 %v863, %v862
        %v929 = vpack.c.b16 %v865, %v864
        %v930 = vpack.c.b16 %v867, %v866
        %v931 = vpack.c.b16 %v869, %v868
        %v932 = vpack.c.b16 %v871, %v870
        %v933 = vpack.c.b16 %v873, %v872
        %v934 = vpack.c.b16 %v875, %v874
        %v935 = vpack.c.b16 %v877, %v876
        %v936 = vpack.c.b16 %v879, %v878
        %v937 = vpack.c.b16 %v881, %v880
        %v938 = vpack.c.b16 %v883, %v882
        %v939 = vpack.c.b16 %v885, %v884
        %v940 = vpack.c.b16 %v887, %v886
        %v941 = vpack.c.b16 %v889, %v888
        %v942 = vpack.c.b16 %v891, %v890
        %v943 = vpack.c.b16 %v893, %v892
        %v944 = vpack.c.b16 %v895, %v894
        %v945 = vpack.c.b16 %v897, %v896
        %994 = vmatprep.subr.bf16.mxu0 0
        %995 = vmatpush1.bf16.msra.mxu0 %v898
        %996 = vmatprep.subr.bf16.mxu0 0
        %997 = vmatpush1.bf16.msra.mxu0 %v899
        %998 = vmatprep.subr.bf16.mxu0 0
        %999 = vmatpush1.bf16.msra.mxu0 %v900
        %1000 = vmatprep.subr.bf16.mxu0 0
        %1001 = vmatpush1.bf16.msra.mxu0 %v901
        %1002 = vmatprep.subr.bf16.mxu0 0
        %1003 = vmatpush1.bf16.msra.mxu0 %v902
        %1004 = vmatprep.subr.bf16.mxu0 0
        %1005 = vmatpush1.bf16.msra.mxu0 %v903
        %1006 = vmatprep.subr.bf16.mxu0 0
        %1007 = vmatpush1.bf16.msra.mxu0 %v904
        %1008 = vmatprep.subr.bf16.mxu0 0
        %1009 = vmatpush1.bf16.msra.mxu0 %v905
        %1010 = vmatprep.subr.bf16.mxu0 0
        %1011 = vmatpush1.bf16.msra.mxu0 %v906
        %1012 = vmatprep.subr.bf16.mxu0 0
        %1013 = vmatpush1.bf16.msra.mxu0 %v907
        %1014 = vmatprep.subr.bf16.mxu0 0
        %1015 = vmatpush1.bf16.msra.mxu0 %v908
        %1016 = vmatprep.subr.bf16.mxu0 0
        %1017 = vmatpush1.bf16.msra.mxu0 %v909
        %1018 = vmatprep.subr.bf16.mxu0 0
        %1019 = vmatpush1.bf16.msra.mxu0 %v910
        %1020 = vmatprep.subr.bf16.mxu0 0
        %1021 = vmatpush1.bf16.msra.mxu0 %v911
        %1022 = vmatprep.subr.bf16.mxu0 0
        %1023 = vmatpush1.bf16.msra.mxu0 %v912
        %1024 = vmatprep.subr.bf16.mxu0 0
        %1025 = vmatpush1.bf16.msra.mxu0 %v913
        %1026 = vmatprep.mubr.bf16.mxu0 %v695
        %1027 = vmatmul.mubr.bf16.gmra.mrb[0].mxu0 %v694
        %v1028 = vpop.f32.mrb[0].mxu0
        %v1029 = vadd.f32 0.0, %v1028
        %v1030 = vpop.f32.mrb[0].mxu0
        %v1031 = vpop.f32.mrb[0].mxu0
        %v1032 = vpop.f32.mrb[0].mxu0
        %1033 = vdwg.mxu0
        %1034 = vmatprep.subr.bf16.mxu0 0
        %1035 = vmatpush1.bf16.msra.mxu0 %v914
        %1036 = vmatprep.subr.bf16.mxu0 0
        %1037 = vmatpush1.bf16.msra.mxu0 %v915
        %1038 = vmatprep.subr.bf16.mxu0 0
        %1039 = vmatpush1.bf16.msra.mxu0 %v916
        %1040 = vmatprep.subr.bf16.mxu0 0
        %1041 = vmatpush1.bf16.msra.mxu0 %v917
        %1042 = vmatprep.subr.bf16.mxu0 0
        %1043 = vmatpush1.bf16.msra.mxu0 %v918
        %1044 = vmatprep.subr.bf16.mxu0 0
        %1045 = vmatpush1.bf16.msra.mxu0 %v919
        %1046 = vmatprep.subr.bf16.mxu0 0
        %1047 = vmatpush1.bf16.msra.mxu0 %v920
        %1048 = vmatprep.subr.bf16.mxu0 0
        %1049 = vmatpush1.bf16.msra.mxu0 %v921
        %1050 = vmatprep.subr.bf16.mxu0 0
        %1051 = vmatpush1.bf16.msra.mxu0 %v922
        %1052 = vmatprep.subr.bf16.mxu0 0
        %1053 = vmatpush1.bf16.msra.mxu0 %v923
        %1054 = vmatprep.subr.bf16.mxu0 0
        %1055 = vmatpush1.bf16.msra.mxu0 %v924
        %1056 = vmatprep.subr.bf16.mxu0 0
        %1057 = vmatpush1.bf16.msra.mxu0 %v925
        %1058 = vmatprep.subr.bf16.mxu0 0
        %1059 = vmatpush1.bf16.msra.mxu0 %v926
        %1060 = vmatprep.subr.bf16.mxu0 0
        %1061 = vmatpush1.bf16.msra.mxu0 %v927
        %1062 = vmatprep.subr.bf16.mxu0 0
        %1063 = vmatpush1.bf16.msra.mxu0 %v928
        %1064 = vmatprep.subr.bf16.mxu0 0
        %1065 = vmatpush1.bf16.msra.mxu0 %v929
        %1066 = vmatprep.mubr.bf16.mxu0 %v697
        %1067 = vmatmul.mubr.bf16.gmra.mrb[0].mxu0 %v696
        %v1068 = vpop.f32.mrb[0].mxu0
        %v1069 = vadd.f32 %v1029, %v1068
        %v1070 = vpop.f32.mrb[0].mxu0
        %v1071 = vpop.f32.mrb[0].mxu0
        %v1072 = vpop.f32.mrb[0].mxu0
        %1073 = vdwg.mxu0
        %1074 = vmatprep.subr.bf16.mxu0 0
        %1075 = vmatpush1.bf16.msra.mxu0 %v930
        %1076 = vmatprep.subr.bf16.mxu0 0
        %1077 = vmatpush1.bf16.msra.mxu0 %v931
        %1078 = vmatprep.subr.bf16.mxu0 0
        %1079 = vmatpush1.bf16.msra.mxu0 %v932
        %1080 = vmatprep.subr.bf16.mxu0 0
        %1081 = vmatpush1.bf16.msra.mxu0 %v933
        %1082 = vmatprep.subr.bf16.mxu0 0
        %1083 = vmatpush1.bf16.msra.mxu0 %v934
        %1084 = vmatprep.subr.bf16.mxu0 0
        %1085 = vmatpush1.bf16.msra.mxu0 %v935
        %1086 = vmatprep.subr.bf16.mxu0 0
        %1087 = vmatpush1.bf16.msra.mxu0 %v936
        %1088 = vmatprep.subr.bf16.mxu0 0
        %1089 = vmatpush1.bf16.msra.mxu0 %v937
        %1090 = vmatprep.subr.bf16.mxu0 0
        %1091 = vmatpush1.bf16.msra.mxu0 %v938
        %1092 = vmatprep.subr.bf16.mxu0 0
        %1093 = vmatpush1.bf16.msra.mxu0 %v939
        %1094 = vmatprep.subr.bf16.mxu0 0
        %1095 = vmatpush1.bf16.msra.mxu0 %v940
        %1096 = vmatprep.subr.bf16.mxu0 0
        %1097 = vmatpush1.bf16.msra.mxu0 %v941
        %1098 = vmatprep.subr.bf16.mxu0 0
        %1099 = vmatpush1.bf16.msra.mxu0 %v942
        %1100 = vmatprep.subr.bf16.mxu0 0
        %1101 = vmatpush1.bf16.msra.mxu0 %v943
        %1102 = vmatprep.subr.bf16.mxu0 0
        %1103 = vmatpush1.bf16.msra.mxu0 %v944
        %1104 = vmatprep.subr.bf16.mxu0 0
        %1105 = vmatpush1.bf16.msra.mxu0 %v945
        %1106 = vmatprep.mubr.bf16.mxu0 %v699
        %1107 = vmatmul.mubr.bf16.gmra.mrb[0].mxu0 %v698
        %v1108 = vpop.f32.mrb[0].mxu0
        %v1109 = vadd.f32 %v1069, %v1108
        %v1110 = vpop.f32.mrb[0].mxu0
        %v1111 = vpop.f32.mrb[0].mxu0
        %v1112 = vpop.f32.mrb[0].mxu0
        %1113 = vdwg.mxu0
        %v1114 = vsel %vm311, %v1109, 0.0
        %1115 = vadd.xlane.f32.xlu0 %v1114
        %v1116 = vpop.xlane.xlu0 %1115
        %v1117 = vrcp.pop 128.0
        %v1118 = vmul.f32 %v1116, %v1117
        %v1119 = vsub.f32 %v1109, %v1118
        %v1120 = vmul.f32 %v1119, %v1119
        %v1121 = vsel %vm311, %v1120, 0.0
        %1122 = vadd.xlane.f32.xlu0 %v1121
        %v1123 = vpop.xlane.xlu0 %1122
        %v1124 = vmul.f32 %v1123, %v1117
        %v1125 = vadd.f32 %v1124, 1e-05
        %v1126 = vrsqrt.pop %v1125
        %v1127 = vmul.f32 %v1119, %v1126
        %v1128 = vld [vmem:[%s2] sm:$0x1]
        %v1130 = vlaneseq
        %v1131 = vshrl.u32 %v1130, 7
        %v1132 = vsub.s32 0, %v1131
        %v1133 = vrot.slane %v1128, %v1132
        %v1135 = vmul.f32 %v1127, %v1133
        %v1136 = vld [vmem:[%s3] sm:$0x1]
        %v1138 = vlaneseq
        %v1139 = vshrl.u32 %v1138, 7
        %v1140 = vsub.s32 0, %v1139
        %v1141 = vrot.slane %v1136, %v1140
        %v1143 = vadd.f32 %v1135, %v1141
        %v1144 = vpack.c.bf16 %v1143, %v1143
        %v1145 = vld [vmem:[%s4] sm:$0xff]
        %v1146 = vld [vmem:[%s4 + $0x8] sm:$0xff]
        %v1147 = vld [vmem:[%s4 + $0x10] sm:$0xff]
        %v1148 = vld [vmem:[%s4 + $0x18] sm:$0xff]
        %v1149 = vld [vmem:[%s4 + $0x20] sm:$0xff]
        %v1150 = vld [vmem:[%s4 + $0x28] sm:$0xff]
        %v1151 = vld [vmem:[%s4 + $0x30] sm:$0xff]
        %v1152 = vld [vmem:[%s4 + $0x38] sm:$0xff]
        %v1153 = vld [vmem:[%s4 + $0x40] sm:$0xff]
        %v1154 = vld [vmem:[%s4 + $0x48] sm:$0xff]
        %v1155 = vld [vmem:[%s4 + $0x50] sm:$0xff]
        %v1156 = vld [vmem:[%s4 + $0x58] sm:$0xff]
        %v1157 = vld [vmem:[%s4 + $0x60] sm:$0xff]
        %v1158 = vld [vmem:[%s4 + $0x68] sm:$0xff]
        %v1159 = vld [vmem:[%s4 + $0x70] sm:$0xff]
        %v1160 = vld [vmem:[%s4 + $0x78] sm:$0xff]
        %v1161 = vld [vmem:[%s4 + $0x80] sm:$0xff]
        %v1162 = vld [vmem:[%s4 + $0x88] sm:$0xff]
        %v1163 = vld [vmem:[%s4 + $0x90] sm:$0xff]
        %v1164 = vld [vmem:[%s4 + $0x98] sm:$0xff]
        %v1165 = vld [vmem:[%s4 + $0xa0] sm:$0xff]
        %v1166 = vld [vmem:[%s4 + $0xa8] sm:$0xff]
        %v1167 = vld [vmem:[%s4 + $0xb0] sm:$0xff]
        %v1168 = vld [vmem:[%s4 + $0xb8] sm:$0xff]
        %v1169 = vld [vmem:[%s4 + $0xc0] sm:$0xff]
        %v1170 = vld [vmem:[%s4 + $0xc8] sm:$0xff]
        %v1171 = vld [vmem:[%s4 + $0xd0] sm:$0xff]
        %v1172 = vld [vmem:[%s4 + $0xd8] sm:$0xff]
        %v1173 = vld [vmem:[%s4 + $0xe0] sm:$0xff]
        %v1174 = vld [vmem:[%s4 + $0xe8] sm:$0xff]
        %v1175 = vld [vmem:[%s4 + $0xf0] sm:$0xff]
        %v1176 = vld [vmem:[%s4 + $0xf8] sm:$0xff]
        %v1209 = vunpack.c.l.b16 %v1145
        %v1210 = vunpack.c.h.b16 %v1145
        %v1211 = vunpack.c.l.b16 %v1146
        %v1212 = vunpack.c.h.b16 %v1146
        %v1213 = vunpack.c.l.b16 %v1147
        %v1214 = vunpack.c.h.b16 %v1147
        %v1215 = vunpack.c.l.b16 %v1148
        %v1216 = vunpack.c.h.b16 %v1148
        %v1217 = vunpack.c.l.b16 %v1149
        %v1218 = vunpack.c.h.b16 %v1149
        %v1219 = vunpack.c.l.b16 %v1150
        %v1220 = vunpack.c.h.b16 %v1150
        %v1221 = vunpack.c.l.b16 %v1151
        %v1222 = vunpack.c.h.b16 %v1151
        %v1223 = vunpack.c.l.b16 %v1152
        %v1224 = vunpack.c.h.b16 %v1152
        %v1225 = vunpack.c.l.b16 %v1153
        %v1226 = vunpack.c.h.b16 %v1153
        %v1227 = vunpack.c.l.b16 %v1154
        %v1228 = vunpack.c.h.b16 %v1154
        %v1229 = vunpack.c.l.b16 %v1155
        %v1230 = vunpack.c.h.b16 %v1155
        %v1231 = vunpack.c.l.b16 %v1156
        %v1232 = vunpack.c.h.b16 %v1156
        %v1233 = vunpack.c.l.b16 %v1157
        %v1234 = vunpack.c.h.b16 %v1157
        %v1235 = vunpack.c.l.b16 %v1158
        %v1236 = vunpack.c.h.b16 %v1158
        %v1237 = vunpack.c.l.b16 %v1159
        %v1238 = vunpack.c.h.b16 %v1159
        %v1239 = vunpack.c.l.b16 %v1160
        %v1240 = vunpack.c.h.b16 %v1160
        %v1241 = vunpack.c.l.b16 %v1161
        %v1242 = vunpack.c.h.b16 %v1161
        %v1243 = vunpack.c.l.b16 %v1162
        %v1244 = vunpack.c.h.b16 %v1162
        %v1245 = vunpack.c.l.b16 %v1163
        %v1246 = vunpack.c.h.b16 %v1163
        %v1247 = vunpack.c.l.b16 %v1164
        %v1248 = vunpack.c.h.b16 %v1164
        %v1249 = vunpack.c.l.b16 %v1165
        %v1250 = vunpack.c.h.b16 %v1165
        %v1251 = vunpack.c.l.b16 %v1166
        %v1252 = vunpack.c.h.b16 %v1166
        %v1253 = vunpack.c.l.b16 %v1167
        %v1254 = vunpack.c.h.b16 %v1167
        %v1255 = vunpack.c.l.b16 %v1168
        %v1256 = vunpack.c.h.b16 %v1168
        %v1257 = vunpack.c.l.b16 %v1169
        %v1258 = vunpack.c.h.b16 %v1169
        %v1259 = vunpack.c.l.b16 %v1170
        %v1260 = vunpack.c.h.b16 %v1170
        %v1261 = vunpack.c.l.b16 %v1171
        %v1262 = vunpack.c.h.b16 %v1171
        %v1263 = vunpack.c.l.b16 %v1172
        %v1264 = vunpack.c.h.b16 %v1172
        %v1265 = vunpack.c.l.b16 %v1173
        %v1266 = vunpack.c.h.b16 %v1173
        %v1267 = vunpack.c.l.b16 %v1174
        %v1268 = vunpack.c.h.b16 %v1174
        %v1269 = vunpack.c.l.b16 %v1175
        %v1270 = vunpack.c.h.b16 %v1175
        %v1271 = vunpack.c.l.b16 %v1176
        %v1272 = vunpack.c.h.b16 %v1176
        %v1273 = vpack.c.b16 %v1213, %v1209
        %v1274 = vpack.c.b16 %v1214, %v1210
        %v1275 = vpack.c.b16 %v1215, %v1211
        %v1276 = vpack.c.b16 %v1216, %v1212
        %v1277 = vpack.c.b16 %v1221, %v1217
        %v1278 = vpack.c.b16 %v1222, %v1218
        %v1279 = vpack.c.b16 %v1223, %v1219
        %v1280 = vpack.c.b16 %v1224, %v1220
        %v1281 = vpack.c.b16 %v1229, %v1225
        %v1282 = vpack.c.b16 %v1230, %v1226
        %v1283 = vpack.c.b16 %v1231, %v1227
        %v1284 = vpack.c.b16 %v1232, %v1228
        %v1285 = vpack.c.b16 %v1237, %v1233
        %v1286 = vpack.c.b16 %v1238, %v1234
        %v1287 = vpack.c.b16 %v1239, %v1235
        %v1288 = vpack.c.b16 %v1240, %v1236
        %v1289 = vpack.c.b16 %v1245, %v1241
        %v1290 = vpack.c.b16 %v1246, %v1242
        %v1291 = vpack.c.b16 %v1247, %v1243
        %v1292 = vpack.c.b16 %v1248, %v1244
        %v1293 = vpack.c.b16 %v1253, %v1249
        %v1294 = vpack.c.b16 %v1254, %v1250
        %v1295 = vpack.c.b16 %v1255, %v1251
        %v1296 = vpack.c.b16 %v1256, %v1252
        %v1297 = vpack.c.b16 %v1261, %v1257
        %v1298 = vpack.c.b16 %v1262, %v1258
        %v1299 = vpack.c.b16 %v1263, %v1259
        %v1300 = vpack.c.b16 %v1264, %v1260
        %v1301 = vpack.c.b16 %v1269, %v1265
        %v1302 = vpack.c.b16 %v1270, %v1266
        %v1303 = vpack.c.b16 %v1271, %v1267
        %v1304 = vpack.c.b16 %v1272, %v1268
        %1337 = vmatprep.subr.bf16.mxu0 %v1274
        %1338 = vmatpush1.bf16.msra.mxu0 %v1273
        %1339 = vmatprep.subr.bf16.mxu0 %v1278
        %1340 = vmatpush1.bf16.msra.mxu0 %v1277
        %1341 = vmatprep.subr.bf16.mxu0 %v1282
        %1342 = vmatpush1.bf16.msra.mxu0 %v1281
        %1343 = vmatprep.subr.bf16.mxu0 %v1286
        %1344 = vmatpush1.bf16.msra.mxu0 %v1285
        %1345 = vmatprep.subr.bf16.mxu0 %v1290
        %1346 = vmatpush1.bf16.msra.mxu0 %v1289
        %1347 = vmatprep.subr.bf16.mxu0 %v1294
        %1348 = vmatpush1.bf16.msra.mxu0 %v1293
        %1349 = vmatprep.subr.bf16.mxu0 %v1298
        %1350 = vmatpush1.bf16.msra.mxu0 %v1297
        %1351 = vmatprep.subr.bf16.mxu0 %v1302
        %1352 = vmatpush1.bf16.msra.mxu0 %v1301
        %1353 = vmatprep.subr.bf16.mxu0 0
        %1354 = vmatpush1.bf16.msra.mxu0 0
        %1355 = vmatprep.subr.bf16.mxu0 0
        %1356 = vmatpush1.bf16.msra.mxu0 0
        %1357 = vmatprep.subr.bf16.mxu0 0
        %1358 = vmatpush1.bf16.msra.mxu0 0
        %1359 = vmatprep.subr.bf16.mxu0 0
        %1360 = vmatpush1.bf16.msra.mxu0 0
        %1361 = vmatprep.subr.bf16.mxu0 0
        %1362 = vmatpush1.bf16.msra.mxu0 0
        %1363 = vmatprep.subr.bf16.mxu0 0
        %1364 = vmatpush1.bf16.msra.mxu0 0
        %1365 = vmatprep.subr.bf16.mxu0 0
        %1366 = vmatpush1.bf16.msra.mxu0 0
        %1367 = vmatprep.subr.bf16.mxu0 0
        %1368 = vmatpush1.bf16.msra.mxu0 0
        %1369 = vmatprep.mubr.bf16.mxu0 0
        %1370 = vmatmul.mubr.bf16.gmra.mrb[0].mxu0 %v1144
        %v1371 = vpop.f32.mrb[0].mxu0
        %v1372 = vadd.f32 0.0, %v1371
        %v1373 = vpop.f32.mrb[0].mxu0
        %v1374 = vadd.f32 0.0, %v1373
        %v1375 = vpop.f32.mrb[0].mxu0
        %v1376 = vpop.f32.mrb[0].mxu0
        %1377 = vdwg.mxu0
        %1378 = vmatprep.subr.bf16.mxu0 %v1276
        %1379 = vmatpush1.bf16.msra.mxu0 %v1275
        %1380 = vmatprep.subr.bf16.mxu0 %v1280
        %1381 = vmatpush1.bf16.msra.mxu0 %v1279
        %1382 = vmatprep.subr.bf16.mxu0 %v1284
        %1383 = vmatpush1.bf16.msra.mxu0 %v1283
        %1384 = vmatprep.subr.bf16.mxu0 %v1288
        %1385 = vmatpush1.bf16.msra.mxu0 %v1287
        %1386 = vmatprep.subr.bf16.mxu0 %v1292
        %1387 = vmatpush1.bf16.msra.mxu0 %v1291
        %1388 = vmatprep.subr.bf16.mxu0 %v1296
        %1389 = vmatpush1.bf16.msra.mxu0 %v1295
        %1390 = vmatprep.subr.bf16.mxu0 %v1300
        %1391 = vmatpush1.bf16.msra.mxu0 %v1299
        %1392 = vmatprep.subr.bf16.mxu0 %v1304
        %1393 = vmatpush1.bf16.msra.mxu0 %v1303
        %1394 = vmatprep.subr.bf16.mxu0 0
        %1395 = vmatpush1.bf16.msra.mxu0 0
        %1396 = vmatprep.subr.bf16.mxu0 0
        %1397 = vmatpush1.bf16.msra.mxu0 0
        %1398 = vmatprep.subr.bf16.mxu0 0
        %1399 = vmatpush1.bf16.msra.mxu0 0
        %1400 = vmatprep.subr.bf16.mxu0 0
        %1401 = vmatpush1.bf16.msra.mxu0 0
        %1402 = vmatprep.subr.bf16.mxu0 0
        %1403 = vmatpush1.bf16.msra.mxu0 0
        %1404 = vmatprep.subr.bf16.mxu0 0
        %1405 = vmatpush1.bf16.msra.mxu0 0
        %1406 = vmatprep.subr.bf16.mxu0 0
        %1407 = vmatpush1.bf16.msra.mxu0 0
        %1408 = vmatprep.subr.bf16.mxu0 0
        %1409 = vmatpush1.bf16.msra.mxu0 0
        %1410 = vmatprep.mubr.bf16.mxu0 0
        %1411 = vmatmul.mubr.bf16.gmra.mrb[0].mxu0 %v1144
        %v1412 = vpop.f32.mrb[0].mxu0
        %v1413 = vadd.f32 0.0, %v1412
        %v1414 = vpop.f32.mrb[0].mxu0
        %v1415 = vadd.f32 0.0, %v1414
        %v1416 = vpop.f32.mrb[0].mxu0
        %v1417 = vpop.f32.mrb[0].mxu0
        %1418 = vdwg.mxu0
        %v1419 = vmul.f32 %v1372, %v1372
        %v1420 = vmul.f32 %v1374, %v1374
        %v1421 = vmul.f32 %v1413, %v1413
        %v1422 = vmul.f32 %v1415, %v1415
        %v1423 = vsel %vm311, %v1419, 0.0
        %v1424 = vsel %vm311, %v1420, 0.0
        %v1425 = vadd.f32 %v1423, %v1424
        %v1426 = vsel %vm311, %v1421, 0.0
        %v1427 = vadd.f32 %v1425, %v1426
        %v1428 = vsel %vm311, %v1422, 0.0
        %v1429 = vadd.f32 %v1427, %v1428
        %1430 = vadd.xlane.f32.xlu0 %v1429
        %v1431 = vpop.xlane.xlu0 %1430
        %v1432 = vrsqrt.pop %v1431
        %v1433 = vmul.f32 %v1372, %v1432
        %v1434 = vmul.f32 %v1374, %v1432
        %v1435 = vmul.f32 %v1413, %v1432
        %v1436 = vmul.f32 %v1415, %v1432
        %v1437 = vpack.c.bf16 %v1433, %v1433
        %v1438 = vpack.c.bf16 %v1434, %v1434
        %v1439 = vpack.c.bf16 %v1435, %v1435
        %v1440 = vpack.c.bf16 %v1436, %v1436
        %v1441 = vld [vmem:[%s5] sm:$0xf]
        %v1442 = vld [vmem:[%s5 + $0x4] sm:$0xf]
        %v1443 = vld [vmem:[%s5 + $0x8] sm:$0xf]
        %v1444 = vld [vmem:[%s5 + $0xc] sm:$0xf]
        %v1445 = vld [vmem:[%s5 + $0x10] sm:$0xf]
        %v1446 = vld [vmem:[%s5 + $0x14] sm:$0xf]
        %v1447 = vld [vmem:[%s5 + $0x18] sm:$0xf]
        %v1448 = vld [vmem:[%s5 + $0x1c] sm:$0xf]
        %v1449 = vld [vmem:[%s5 + $0x20] sm:$0xf]
        %v1450 = vld [vmem:[%s5 + $0x24] sm:$0xf]
        %v1451 = vld [vmem:[%s5 + $0x28] sm:$0xf]
        %v1452 = vld [vmem:[%s5 + $0x2c] sm:$0xf]
        %v1453 = vld [vmem:[%s5 + $0x30] sm:$0xf]
        %v1454 = vld [vmem:[%s5 + $0x34] sm:$0xf]
        %v1455 = vld [vmem:[%s5 + $0x38] sm:$0xf]
        %v1456 = vld [vmem:[%s5 + $0x3c] sm:$0xf]
        %v1457 = vld [vmem:[%s5 + $0x40] sm:$0xf]
        %v1458 = vld [vmem:[%s5 + $0x44] sm:$0xf]
        %v1459 = vld [vmem:[%s5 + $0x48] sm:$0xf]
        %v1460 = vld [vmem:[%s5 + $0x4c] sm:$0xf]
        %v1461 = vld [vmem:[%s5 + $0x50] sm:$0xf]
        %v1462 = vld [vmem:[%s5 + $0x54] sm:$0xf]
        %v1463 = vld [vmem:[%s5 + $0x58] sm:$0xf]
        %v1464 = vld [vmem:[%s5 + $0x5c] sm:$0xf]
        %v1465 = vld [vmem:[%s5 + $0x60] sm:$0xf]
        %v1466 = vld [vmem:[%s5 + $0x64] sm:$0xf]
        %v1467 = vld [vmem:[%s5 + $0x68] sm:$0xf]
        %v1468 = vld [vmem:[%s5 + $0x6c] sm:$0xf]
        %v1469 = vld [vmem:[%s5 + $0x70] sm:$0xf]
        %v1470 = vld [vmem:[%s5 + $0x74] sm:$0xf]
        %v1471 = vld [vmem:[%s5 + $0x78] sm:$0xf]
        %v1472 = vld [vmem:[%s5 + $0x7c] sm:$0xf]
        %v1473 = vld [vmem:[%s5 + $0x80] sm:$0xf]
        %v1474 = vld [vmem:[%s5 + $0x84] sm:$0xf]
        %v1475 = vld [vmem:[%s5 + $0x88] sm:$0xf]
        %v1476 = vld [vmem:[%s5 + $0x8c] sm:$0xf]
        %v1477 = vld [vmem:[%s5 + $0x90] sm:$0xf]
        %v1478 = vld [vmem:[%s5 + $0x94] sm:$0xf]
        %v1479 = vld [vmem:[%s5 + $0x98] sm:$0xf]
        %v1480 = vld [vmem:[%s5 + $0x9c] sm:$0xf]
        %v1481 = vld [vmem:[%s5 + $0xa0] sm:$0xf]
        %v1482 = vld [vmem:[%s5 + $0xa4] sm:$0xf]
        %v1483 = vld [vmem:[%s5 + $0xa8] sm:$0xf]
        %v1484 = vld [vmem:[%s5 + $0xac] sm:$0xf]
        %v1485 = vld [vmem:[%s5 + $0xb0] sm:$0xf]
        %v1486 = vld [vmem:[%s5 + $0xb4] sm:$0xf]
        %v1487 = vld [vmem:[%s5 + $0xb8] sm:$0xf]
        %v1488 = vld [vmem:[%s5 + $0xbc] sm:$0xf]
        %v1489 = vld [vmem:[%s5 + $0xc0] sm:$0xf]
        %v1490 = vld [vmem:[%s5 + $0xc4] sm:$0xf]
        %v1491 = vld [vmem:[%s5 + $0xc8] sm:$0xf]
        %v1492 = vld [vmem:[%s5 + $0xcc] sm:$0xf]
        %v1493 = vld [vmem:[%s5 + $0xd0] sm:$0xf]
        %v1494 = vld [vmem:[%s5 + $0xd4] sm:$0xf]
        %v1495 = vld [vmem:[%s5 + $0xd8] sm:$0xf]
        %v1496 = vld [vmem:[%s5 + $0xdc] sm:$0xf]
        %v1497 = vld [vmem:[%s5 + $0xe0] sm:$0xf]
        %v1498 = vld [vmem:[%s5 + $0xe4] sm:$0xf]
        %v1499 = vld [vmem:[%s5 + $0xe8] sm:$0xf]
        %v1500 = vld [vmem:[%s5 + $0xec] sm:$0xf]
        %v1501 = vld [vmem:[%s5 + $0xf0] sm:$0xf]
        %v1502 = vld [vmem:[%s5 + $0xf4] sm:$0xf]
        %v1503 = vld [vmem:[%s5 + $0xf8] sm:$0xf]
        %v1504 = vld [vmem:[%s5 + $0xfc] sm:$0xf]
        %v1569 = vunpack.c.l.b16 %v1441
        %v1570 = vunpack.c.l.b16 %v1442
        %v1571 = vunpack.c.l.b16 %v1443
        %v1572 = vunpack.c.l.b16 %v1444
        %v1573 = vunpack.c.l.b16 %v1445
        %v1574 = vunpack.c.l.b16 %v1446
        %v1575 = vunpack.c.l.b16 %v1447
        %v1576 = vunpack.c.l.b16 %v1448
        %v1577 = vunpack.c.l.b16 %v1449
        %v1578 = vunpack.c.l.b16 %v1450
        %v1579 = vunpack.c.l.b16 %v1451
        %v1580 = vunpack.c.l.b16 %v1452
        %v1581 = vunpack.c.l.b16 %v1453
        %v1582 = vunpack.c.l.b16 %v1454
        %v1583 = vunpack.c.l.b16 %v1455
        %v1584 = vunpack.c.l.b16 %v1456
        %v1585 = vunpack.c.l.b16 %v1457
        %v1586 = vunpack.c.l.b16 %v1458
        %v1587 = vunpack.c.l.b16 %v1459
        %v1588 = vunpack.c.l.b16 %v1460
        %v1589 = vunpack.c.l.b16 %v1461
        %v1590 = vunpack.c.l.b16 %v1462
        %v1591 = vunpack.c.l.b16 %v1463
        %v1592 = vunpack.c.l.b16 %v1464
        %v1593 = vunpack.c.l.b16 %v1465
        %v1594 = vunpack.c.l.b16 %v1466
        %v1595 = vunpack.c.l.b16 %v1467
        %v1596 = vunpack.c.l.b16 %v1468
        %v1597 = vunpack.c.l.b16 %v1469
        %v1598 = vunpack.c.l.b16 %v1470
        %v1599 = vunpack.c.l.b16 %v1471
        %v1600 = vunpack.c.l.b16 %v1472
        %v1601 = vunpack.c.l.b16 %v1473
        %v1602 = vunpack.c.l.b16 %v1474
        %v1603 = vunpack.c.l.b16 %v1475
        %v1604 = vunpack.c.l.b16 %v1476
        %v1605 = vunpack.c.l.b16 %v1477
        %v1606 = vunpack.c.l.b16 %v1478
        %v1607 = vunpack.c.l.b16 %v1479
        %v1608 = vunpack.c.l.b16 %v1480
        %v1609 = vunpack.c.l.b16 %v1481
        %v1610 = vunpack.c.l.b16 %v1482
        %v1611 = vunpack.c.l.b16 %v1483
        %v1612 = vunpack.c.l.b16 %v1484
        %v1613 = vunpack.c.l.b16 %v1485
        %v1614 = vunpack.c.l.b16 %v1486
        %v1615 = vunpack.c.l.b16 %v1487
        %v1616 = vunpack.c.l.b16 %v1488
        %v1617 = vunpack.c.l.b16 %v1489
        %v1618 = vunpack.c.l.b16 %v1490
        %v1619 = vunpack.c.l.b16 %v1491
        %v1620 = vunpack.c.l.b16 %v1492
        %v1621 = vunpack.c.l.b16 %v1493
        %v1622 = vunpack.c.l.b16 %v1494
        %v1623 = vunpack.c.l.b16 %v1495
        %v1624 = vunpack.c.l.b16 %v1496
        %v1625 = vunpack.c.l.b16 %v1497
        %v1626 = vunpack.c.l.b16 %v1498
        %v1627 = vunpack.c.l.b16 %v1499
        %v1628 = vunpack.c.l.b16 %v1500
        %v1629 = vunpack.c.l.b16 %v1501
        %v1630 = vunpack.c.l.b16 %v1502
        %v1631 = vunpack.c.l.b16 %v1503
        %v1632 = vunpack.c.l.b16 %v1504
        %v1633 = vpack.c.b16 %v1570, %v1569
        %v1634 = vpack.c.b16 %v1572, %v1571
        %v1635 = vpack.c.b16 %v1574, %v1573
        %v1636 = vpack.c.b16 %v1576, %v1575
        %v1637 = vpack.c.b16 %v1578, %v1577
        %v1638 = vpack.c.b16 %v1580, %v1579
        %v1639 = vpack.c.b16 %v1582, %v1581
        %v1640 = vpack.c.b16 %v1584, %v1583
        %v1641 = vpack.c.b16 %v1586, %v1585
        %v1642 = vpack.c.b16 %v1588, %v1587
        %v1643 = vpack.c.b16 %v1590, %v1589
        %v1644 = vpack.c.b16 %v1592, %v1591
        %v1645 = vpack.c.b16 %v1594, %v1593
        %v1646 = vpack.c.b16 %v1596, %v1595
        %v1647 = vpack.c.b16 %v1598, %v1597
        %v1648 = vpack.c.b16 %v1600, %v1599
        %v1649 = vpack.c.b16 %v1602, %v1601
        %v1650 = vpack.c.b16 %v1604, %v1603
        %v1651 = vpack.c.b16 %v1606, %v1605
        %v1652 = vpack.c.b16 %v1608, %v1607
        %v1653 = vpack.c.b16 %v1610, %v1609
        %v1654 = vpack.c.b16 %v1612, %v1611
        %v1655 = vpack.c.b16 %v1614, %v1613
        %v1656 = vpack.c.b16 %v1616, %v1615
        %v1657 = vpack.c.b16 %v1618, %v1617
        %v1658 = vpack.c.b16 %v1620, %v1619
        %v1659 = vpack.c.b16 %v1622, %v1621
        %v1660 = vpack.c.b16 %v1624, %v1623
        %v1661 = vpack.c.b16 %v1626, %v1625
        %v1662 = vpack.c.b16 %v1628, %v1627
        %v1663 = vpack.c.b16 %v1630, %v1629
        %v1664 = vpack.c.b16 %v1632, %v1631
        %1697 = vmatprep.subr.bf16.mxu0 0
        %1698 = vmatpush1.bf16.msra.mxu0 %v1633
        %1699 = vmatprep.subr.bf16.mxu0 0
        %1700 = vmatpush1.bf16.msra.mxu0 %v1634
        %1701 = vmatprep.subr.bf16.mxu0 0
        %1702 = vmatpush1.bf16.msra.mxu0 %v1635
        %1703 = vmatprep.subr.bf16.mxu0 0
        %1704 = vmatpush1.bf16.msra.mxu0 %v1636
        %1705 = vmatprep.subr.bf16.mxu0 0
        %1706 = vmatpush1.bf16.msra.mxu0 %v1637
        %1707 = vmatprep.subr.bf16.mxu0 0
        %1708 = vmatpush1.bf16.msra.mxu0 %v1638
        %1709 = vmatprep.subr.bf16.mxu0 0
        %1710 = vmatpush1.bf16.msra.mxu0 %v1639
        %1711 = vmatprep.subr.bf16.mxu0 0
        %1712 = vmatpush1.bf16.msra.mxu0 %v1640
        %1713 = vmatprep.subr.bf16.mxu0 0
        %1714 = vmatpush1.bf16.msra.mxu0 %v1641
        %1715 = vmatprep.subr.bf16.mxu0 0
        %1716 = vmatpush1.bf16.msra.mxu0 %v1642
        %1717 = vmatprep.subr.bf16.mxu0 0
        %1718 = vmatpush1.bf16.msra.mxu0 %v1643
        %1719 = vmatprep.subr.bf16.mxu0 0
        %1720 = vmatpush1.bf16.msra.mxu0 %v1644
        %1721 = vmatprep.subr.bf16.mxu0 0
        %1722 = vmatpush1.bf16.msra.mxu0 %v1645
        %1723 = vmatprep.subr.bf16.mxu0 0
        %1724 = vmatpush1.bf16.msra.mxu0 %v1646
        %1725 = vmatprep.subr.bf16.mxu0 0
        %1726 = vmatpush1.bf16.msra.mxu0 %v1647
        %1727 = vmatprep.subr.bf16.mxu0 0
        %1728 = vmatpush1.bf16.msra.mxu0 %v1648
        %1729 = vmatprep.mubr.bf16.mxu0 %v1438
        %1730 = vmatmul.mubr.bf16.gmra.mrb[0].mxu0 %v1437
        %v1731 = vpop.f32.mrb[0].mxu0
        %v1732 = vadd.f32 0.0, %v1731
        %v1733 = vpop.f32.mrb[0].mxu0
        %v1734 = vpop.f32.mrb[0].mxu0
        %v1735 = vpop.f32.mrb[0].mxu0
        %1736 = vdwg.mxu0
        %1737 = vmatprep.subr.bf16.mxu0 0
        %1738 = vmatpush1.bf16.msra.mxu0 %v1649
        %1739 = vmatprep.subr.bf16.mxu0 0
        %1740 = vmatpush1.bf16.msra.mxu0 %v1650
        %1741 = vmatprep.subr.bf16.mxu0 0
        %1742 = vmatpush1.bf16.msra.mxu0 %v1651
        %1743 = vmatprep.subr.bf16.mxu0 0
        %1744 = vmatpush1.bf16.msra.mxu0 %v1652
        %1745 = vmatprep.subr.bf16.mxu0 0
        %1746 = vmatpush1.bf16.msra.mxu0 %v1653
        %1747 = vmatprep.subr.bf16.mxu0 0
        %1748 = vmatpush1.bf16.msra.mxu0 %v1654
        %1749 = vmatprep.subr.bf16.mxu0 0
        %1750 = vmatpush1.bf16.msra.mxu0 %v1655
        %1751 = vmatprep.subr.bf16.mxu0 0
        %1752 = vmatpush1.bf16.msra.mxu0 %v1656
        %1753 = vmatprep.subr.bf16.mxu0 0
        %1754 = vmatpush1.bf16.msra.mxu0 %v1657
        %1755 = vmatprep.subr.bf16.mxu0 0
        %1756 = vmatpush1.bf16.msra.mxu0 %v1658
        %1757 = vmatprep.subr.bf16.mxu0 0
        %1758 = vmatpush1.bf16.msra.mxu0 %v1659
        %1759 = vmatprep.subr.bf16.mxu0 0
        %1760 = vmatpush1.bf16.msra.mxu0 %v1660
        %1761 = vmatprep.subr.bf16.mxu0 0
        %1762 = vmatpush1.bf16.msra.mxu0 %v1661
        %1763 = vmatprep.subr.bf16.mxu0 0
        %1764 = vmatpush1.bf16.msra.mxu0 %v1662
        %1765 = vmatprep.subr.bf16.mxu0 0
        %1766 = vmatpush1.bf16.msra.mxu0 %v1663
        %1767 = vmatprep.subr.bf16.mxu0 0
        %1768 = vmatpush1.bf16.msra.mxu0 %v1664
        %1769 = vmatprep.mubr.bf16.mxu0 %v1440
        %1770 = vmatmul.mubr.bf16.gmra.mrb[0].mxu0 %v1439
        %v1771 = vpop.f32.mrb[0].mxu0
        %v1772 = vadd.f32 %v1732, %v1771
        %v1773 = vpop.f32.mrb[0].mxu0
        %v1774 = vpop.f32.mrb[0].mxu0
        %v1775 = vpop.f32.mrb[0].mxu0
        %1776 = vdwg.mxu0
        %v1777 = vsel %vm311, %v1772, 0.0
        %v1778 = vrot.slane %v1777, 4
        %v1779 = vadd.f32 %v1777, %v1778
        %v1780 = vrot.slane %v1779, 2
        %v1781 = vadd.f32 %v1779, %v1780
        %v1782 = vrot.slane %v1781, 1
        %v1783 = vadd.f32 %v1781, %v1782
        %1784 = vst [vmem:[%s246] sm:$0x1] %v1783
        %s1785 = sand.u32 %s159, 1
        %s1786 = scalar_lea.sflag [#allocation3], %s1785
        %s1787 = sand.u32 %s159, 1
        %s1788 = scalar_lea.vmem [#allocation2], %s1787
        // Predicated region
        $region45: #{_forward_impl.1} parent=43 // pred_check
          %p1789 = pneg %p169
        $region46: #{_forward_impl.1} parent=43 // pred_check_branch
          %1791 = sbr.rel (%p1789) target = $region48
        $region47: #{_forward_impl.1} parent=43 // pred_region
          %s1793 = ssub.s32 16, 16
          %1794 = vsyncadd %s1786, %s1793
          %s1795 = smul.addr %s20, 16
          %s1796 = scalar_lea.hbm %s6, %s1795
          %s1798 = sshll.u32 %s1788, 4
          %s1799 = int_to_ptr.vmem [resolvable:$true] %s1798
          %1801 = dma.vmem_to_hbm [thread:$0]  %s1799, 16, %s1796, %s1786
        $region48: #{_forward_impl.1} parent=43 // pred_fallthru
          _
      $region44: #{_forward_impl.1} parent=5 // pred_fallthru
        _
      %p1802 = scmp.le.s32.totalorder 2, %s15
      // Predicated region
      $region49: #{_forward_impl.1} parent=5 // pred_check
        %p1803 = pneg %p1802
      $region50: #{_forward_impl.1} parent=5 // pred_check_branch
        %1805 = sbr.rel (%p1803) target = $region52
      $region51: #{_forward_impl.1} parent=5 // pred_region
        %s1806 = ssub.s32 %s15, 2
        // Predicated region
        $region53: #{_forward_impl.1} parent=51 // pred_check
          %p1807 = pneg %p175
        $region54: #{_forward_impl.1} parent=51 // pred_check_branch
          %1809 = sbr.rel (%p1807) target = $region56
        $region55: #{_forward_impl.1} parent=51 // pred_region
          %s1810 = sand.u32 %s160, 1
          %s1811 = scalar_lea.sflag [#allocation3], %s1810
          %s1812 = sand.u32 %s160, 1
          %s1813 = scalar_lea.vmem [#allocation2], %s1812
          %1814 = dma.done %s1811, 16
        $region56: #{_forward_impl.1} parent=51 // pred_fallthru
          _
      $region52: #{_forward_impl.1} parent=5 // pred_fallthru
        _
    $region6: #{_forward_impl.1} parent=1 // loop_footer
      %s19 = sadd.s32 1, %s15
    $region7: #{_forward_impl.1} parent=1 // loop_footer_branch
      %14 = sbr.rel target = $region3
    $region8: #{_forward_impl.1} parent=1 // loop_exit
      _
    %1815 = vsyncpa [#allocation3], 1
    %s1816 = scalar_lea.sflag [#allocation3], 1
    %1817 = vsyncpa %s1816, 1

</llo_original>
